<compile_context>
chip_gen: v5e
topology: v5e:2x2
jax: 0.10.0
libtpu: 0.0.40
codegen_flags: <defaults>
</compile_context>

<pallas_src>
import math
from functools import partial

import jax
import jax.numpy as jnp
from jax import lax
from jax.experimental import pallas as pl
from jax.experimental.pallas import tpu as pltpu

# ----------------------------- config ---------------------------------------
CFG = dict(
    vocab=256,       # resized token embedding size (synthetic)
    d_model=32,
    n_heads=4,
    d_kv=8,          # d_model = n_heads * d_kv
    d_ff=64,
    n_layers=2,      # encoder layers == decoder layers
    n_buckets=32,
    max_dist=128,
    eps=1e-6,
)
NEG_INF = -1e9

# ----------------------------- Pallas kernels -------------------------------

def _self_attn_block_kernel(x_ref, ln_ref, wqkv_ref, wo_ref, bias_ref, mask_ref,
                            o_ref, *, H, Dh, eps):
    """Fused: RMSNorm -> QKV -> per-head attn -> O proj -> residual. One batch."""
    x = x_ref[0]                                              # (S, D) f32
    HD = H * Dh
    var = jnp.mean(x * x, axis=-1, keepdims=True)
    xn = (x * lax.rsqrt(var + eps) * ln_ref[...]).astype(jnp.bfloat16)
    qkv = jnp.dot(xn, wqkv_ref[...],
                  preferred_element_type=jnp.float32)         # (S, 3*HD)
    bias = bias_ref[...]                                      # (H, S, S) f32
    mask = mask_ref[0]                                        # (1, S)  f32
    ctx = []
    for h in range(H):
        q = qkv[:, h * Dh:(h + 1) * Dh].astype(jnp.bfloat16)
        k = qkv[:, HD + h * Dh:HD + (h + 1) * Dh].astype(jnp.bfloat16)
        v = qkv[:, 2 * HD + h * Dh:2 * HD + (h + 1) * Dh].astype(jnp.bfloat16)
        # NOTE: T5 does NOT scale scores by 1/sqrt(d_kv).
        s = lax.dot_general(q, k, (((1,), (1,)), ((), ())),
                            preferred_element_type=jnp.float32)   # (S, S)
        s = s + bias[h] + mask
        m = jnp.max(s, axis=-1, keepdims=True)
        p = jnp.exp(s - m)
        l = jnp.sum(p, axis=-1, keepdims=True)
        p = (p * pl.reciprocal(l, approx=True)).astype(jnp.bfloat16)
        ctx.append(jnp.dot(p, v, preferred_element_type=jnp.float32))
    ctx = jnp.concatenate(ctx, axis=-1).astype(jnp.bfloat16)      # (S, HD)
    attn = jnp.dot(ctx, wo_ref[...], preferred_element_type=jnp.float32)
    o_ref[0] = x + attn                                           # fused residual


def _cross_attn_block_kernel(x_ref, enc_ref, ln_ref, wq_ref, wkv_ref, wo_ref,
                             mask_ref, o_ref, *, H, Dh, eps):
    """Fused decoder cross-attention block (no position bias in T5 cross-attn)."""
    x = x_ref[0]                                              # (Sd, D) f32
    e = enc_ref[0].astype(jnp.bfloat16)                       # (Se, D)
    HD = H * Dh
    var = jnp.mean(x * x, axis=-1, keepdims=True)
    xn = (x * lax.rsqrt(var + eps) * ln_ref[...]).astype(jnp.bfloat16)
    qh = jnp.dot(xn, wq_ref[...], preferred_element_type=jnp.float32)   # (Sd, HD)
    kv = jnp.dot(e, wkv_ref[...], preferred_element_type=jnp.float32)   # (Se, 2HD)
    mask = mask_ref[0]                                        # (1, Se) f32
    ctx = []
    for h in range(H):
        q = qh[:, h * Dh:(h + 1) * Dh].astype(jnp.bfloat16)
        k = kv[:, h * Dh:(h + 1) * Dh].astype(jnp.bfloat16)
        v = kv[:, HD + h * Dh:HD + (h + 1) * Dh].astype(jnp.bfloat16)
        s = lax.dot_general(q, k, (((1,), (1,)), ((), ())),
                            preferred_element_type=jnp.float32)         # (Sd, Se)
        s = s + mask
        m = jnp.max(s, axis=-1, keepdims=True)
        p = jnp.exp(s - m)
        l = jnp.sum(p, axis=-1, keepdims=True)
        p = (p * pl.reciprocal(l, approx=True)).astype(jnp.bfloat16)
        ctx.append(jnp.dot(p, v, preferred_element_type=jnp.float32))
    ctx = jnp.concatenate(ctx, axis=-1).astype(jnp.bfloat16)
    attn = jnp.dot(ctx, wo_ref[...], preferred_element_type=jnp.float32)
    o_ref[0] = x + attn


def _ffn_block_kernel(x_ref, ln_ref, wi_ref, wo_ref, o_ref, *, eps, F):
    """Fused: RMSNorm -> packed gated-GELU (wi0|wi1) -> wo -> residual."""
    x = x_ref[...]                                            # (TM, D) f32
    var = jnp.mean(x * x, axis=-1, keepdims=True)
    xn = (x * lax.rsqrt(var + eps) * ln_ref[...]).astype(jnp.bfloat16)
    h = jnp.dot(xn, wi_ref[...], preferred_element_type=jnp.float32)    # (TM, 2F)
    h0 = h[:, :F]
    h1 = h[:, F:]
    # gelu_new (tanh approximation), as used by mT5 gated-gelu (fp32 math).
    g = 0.5 * h0 * (1.0 + jnp.tanh(0.7978845608028654 *
                                   (h0 + 0.044715 * h0 * h0 * h0)))
    hg = (g * h1).astype(jnp.bfloat16)
    o_ref[...] = x + jnp.dot(hg, wo_ref[...], preferred_element_type=jnp.float32)


def _final_head_kernel(x_ref, ln_ref, w_ref, o_ref, *, eps):
    """Fused decoder final RMSNorm + lm_head (lane-dense vocab output)."""
    x = x_ref[...]
    var = jnp.mean(x * x, axis=-1, keepdims=True)
    xn = (x * lax.rsqrt(var + eps) * ln_ref[...]).astype(jnp.bfloat16)
    o_ref[...] = jnp.dot(xn, w_ref[...], preferred_element_type=jnp.float32)


def _rmsnorm_kernel(x_ref, w_ref, o_ref, *, eps):
    x = x_ref[...]
    var = jnp.mean(x * x, axis=-1, keepdims=True)
    o_ref[...] = x * lax.rsqrt(var + eps) * w_ref[...]

# ----------------------------- kernel wrappers -------------------------------

def self_attn_block(x, ln_w, wqkv, wo, bias, mask):
    B, S, D = x.shape
    H, Dh = CFG["n_heads"], CFG["d_kv"]
    HD = H * Dh
    return pl.pallas_call(
        partial(_self_attn_block_kernel, H=H, Dh=Dh, eps=CFG["eps"]),
        out_shape=jax.ShapeDtypeStruct((B, S, D), jnp.float32),
        grid=(B,),
        in_specs=[pl.BlockSpec((1, S, D), lambda b: (b, 0, 0)),
                  pl.BlockSpec((1, D), lambda b: (0, 0)),        # resident
                  pl.BlockSpec((D, 3 * HD), lambda b: (0, 0)),   # resident
                  pl.BlockSpec((HD, D), lambda b: (0, 0)),       # resident
                  pl.BlockSpec((H, S, S), lambda b: (0, 0, 0)),  # resident
                  pl.BlockSpec((1, 1, S), lambda b: (b, 0, 0))],
        out_specs=pl.BlockSpec((1, S, D), lambda b: (b, 0, 0)),
        compiler_params=pltpu.CompilerParams(dimension_semantics=("parallel",)),
    )(x, ln_w.reshape(1, D), wqkv, wo, bias, mask)


def cross_attn_block(x, enc, ln_w, wq, wkv, wo, mask):
    B, Sd, D = x.shape
    Se = enc.shape[1]
    H, Dh = CFG["n_heads"], CFG["d_kv"]
    HD = H * Dh
    return pl.pallas_call(
        partial(_cross_attn_block_kernel, H=H, Dh=Dh, eps=CFG["eps"]),
        out_shape=jax.ShapeDtypeStruct((B, Sd, D), jnp.float32),
        grid=(B,),
        in_specs=[pl.BlockSpec((1, Sd, D), lambda b: (b, 0, 0)),
                  pl.BlockSpec((1, Se, D), lambda b: (b, 0, 0)),
                  pl.BlockSpec((1, D), lambda b: (0, 0)),
                  pl.BlockSpec((D, HD), lambda b: (0, 0)),
                  pl.BlockSpec((D, 2 * HD), lambda b: (0, 0)),
                  pl.BlockSpec((HD, D), lambda b: (0, 0)),
                  pl.BlockSpec((1, 1, Se), lambda b: (b, 0, 0))],
        out_specs=pl.BlockSpec((1, Sd, D), lambda b: (b, 0, 0)),
        compiler_params=pltpu.CompilerParams(dimension_semantics=("parallel",)),
    )(x, enc, ln_w.reshape(1, D), wq, wkv, wo, mask)


def ffn_block(x, ln_w, wi, wo):
    M, D = x.shape
    F = wo.shape[0]
    TM = 8 if M % 8 == 0 else M
    return pl.pallas_call(
        partial(_ffn_block_kernel, eps=CFG["eps"], F=F),
        out_shape=jax.ShapeDtypeStruct((M, D), jnp.float32),
        grid=(M // TM,),
        in_specs=[pl.BlockSpec((TM, D), lambda i: (i, 0)),
                  pl.BlockSpec((1, D), lambda i: (0, 0)),
                  pl.BlockSpec((D, 2 * F), lambda i: (0, 0)),
                  pl.BlockSpec((F, D), lambda i: (0, 0))],
        out_specs=pl.BlockSpec((TM, D), lambda i: (i, 0)),
        compiler_params=pltpu.CompilerParams(dimension_semantics=("parallel",)),
    )(x, ln_w.reshape(1, D), wi, wo)


def final_norm_head(x, ln_w, w_head):
    M, D = x.shape
    V = w_head.shape[1]
    TM = 8 if M % 8 == 0 else M
    return pl.pallas_call(
        partial(_final_head_kernel, eps=CFG["eps"]),
        out_shape=jax.ShapeDtypeStruct((M, V), jnp.float32),
        grid=(M // TM,),
        in_specs=[pl.BlockSpec((TM, D), lambda i: (i, 0)),
                  pl.BlockSpec((1, D), lambda i: (0, 0)),
                  pl.BlockSpec((D, V), lambda i: (0, 0))],
        out_specs=pl.BlockSpec((TM, V), lambda i: (i, 0)),
        compiler_params=pltpu.CompilerParams(dimension_semantics=("parallel",)),
    )(x, ln_w.reshape(1, D), w_head)


def rmsnorm(x, w):
    M, D = x.shape
    return pl.pallas_call(
        partial(_rmsnorm_kernel, eps=CFG["eps"]),
        out_shape=jax.ShapeDtypeStruct((M, D), jnp.float32),
        grid=(1,),
        in_specs=[pl.BlockSpec((M, D), lambda i: (0, 0)),
                  pl.BlockSpec((1, D), lambda i: (0, 0))],
        out_specs=pl.BlockSpec((M, D), lambda i: (0, 0)),
        compiler_params=pltpu.CompilerParams(dimension_semantics=("arbitrary",)),
    )(x, w.reshape(1, D))

# ----------------------------- T5 glue (plain JAX) --------------------------

def relative_position_bucket(relative_position, bidirectional, num_buckets,
                             max_distance):
    rb = jnp.zeros_like(relative_position)
    if bidirectional:
        num_buckets //= 2
        rb = rb + (relative_position > 0).astype(jnp.int32) * num_buckets
        relative_position = jnp.abs(relative_position)
    else:
        relative_position = -jnp.minimum(relative_position, 0)
    max_exact = num_buckets // 2
    is_small = relative_position < max_exact
    rp_f = jnp.maximum(relative_position, 1).astype(jnp.float32)
    rel_if_large = max_exact + (
        jnp.log(rp_f / max_exact) / math.log(max_distance / max_exact)
        * (num_buckets - max_exact)
    ).astype(jnp.int32)
    rel_if_large = jnp.minimum(rel_if_large, num_buckets - 1)
    return rb + jnp.where(is_small, relative_position, rel_if_large)


def compute_position_bias(table, q_len, k_len, bidirectional):
    ctx = jnp.arange(q_len)[:, None]
    mem = jnp.arange(k_len)[None, :]
    rel = mem - ctx                                               # (q, k)
    bucket = relative_position_bucket(rel, bidirectional,
                                      CFG["n_buckets"], CFG["max_dist"])
    values = jnp.take(table, bucket, axis=0)                      # (q, k, H)
    return jnp.transpose(values, (2, 0, 1)).astype(jnp.float32)   # (H, q, k)


def t5_lm_forward(params, input_ids, attention_mask, decoder_input_ids):
    B, Se = input_ids.shape
    Sd = decoder_input_ids.shape[1]
    D = CFG["d_model"]

    # --- encoder ---
    enc_x = jnp.take(params["embed"], input_ids, axis=0)          # (B, Se, D)
    enc_mask = ((1.0 - attention_mask.astype(jnp.float32))
                * NEG_INF)[:, None, :]                            # (B, 1, Se)
    enc_bias = compute_position_bias(params["enc_rel_bias"], Se, Se, True)
    x = enc_x
    for lp in params["enc_layers"]:
        x = self_attn_block(x, lp["ln_sa"], lp["wqkv"], lp["wo_attn"],
                            enc_bias, enc_mask)
        x = ffn_block(x.reshape(B * Se, D), lp["ln_ff"], lp["wi"],
                      lp["wo_ff"]).reshape(B, Se, D)
    enc_out = rmsnorm(x.reshape(B * Se, D),
                      params["enc_final_ln"]).reshape(B, Se, D)

    # --- decoder ---
    dec_x = jnp.take(params["embed"], decoder_input_ids, axis=0)  # (B, Sd, D)
    causal = jnp.where(jnp.arange(Sd)[None, :] <= jnp.arange(Sd)[:, None],
                       0.0, NEG_INF)                              # (Sd, Sd)
    dec_bias = compute_position_bias(params["dec_rel_bias"], Sd, Sd, False) \
        + causal[None]                                            # (H, Sd, Sd)
    dec_mask = jnp.zeros((B, 1, Sd), jnp.float32)
    cross_mask = enc_mask
    x = dec_x
    for lp in params["dec_layers"]:
        x = self_attn_block(x, lp["ln_sa"], lp["wqkv"], lp["wo_attn"],
                            dec_bias, dec_mask)
        x = cross_attn_block(x, enc_out, lp["ln_ca"], lp["wq_c"], lp["wkv_c"],
                             lp["wo_c"], cross_mask)
        x = ffn_block(x.reshape(B * Sd, D), lp["ln_ff"], lp["wi"],
                      lp["wo_ff"]).reshape(B, Sd, D)

    # --- fused final RMSNorm + LM head (mT5: untied head, no rescale) ---
    logits = final_norm_head(x.reshape(B * Sd, D), params["dec_final_ln"],
                             params["lm_head"])
    return logits.reshape(B, Sd, CFG["vocab"])

# ----------------------------- parameter init -------------------------------

def init_params(key):
    D, H, Dh, F, V = (CFG["d_model"], CFG["n_heads"], CFG["d_kv"],
                      CFG["d_ff"], CFG["vocab"])
    HD = H * Dh
    ks = iter(jax.random.split(key, 256))

    def n(shape, s=0.02, dtype=jnp.bfloat16):
        return (s * jax.random.normal(next(ks), shape, jnp.float32)).astype(dtype)

    def enc_layer():
        return dict(ln_sa=jnp.ones((D,), jnp.float32),
                    wqkv=n((D, 3 * HD)),          # packed Q|K|V (lane-dense out)
                    wo_attn=n((HD, D)),
                    ln_ff=jnp.ones((D,), jnp.float32),
                    wi=n((D, 2 * F)),             # packed wi_0|wi_1 (128-wide out)
                    wo_ff=n((F, D)))

    def dec_layer():
        lp = enc_layer()
        lp.update(ln_ca=jnp.ones((D,), jnp.float32),
                  wq_c=n((D, HD)),
                  wkv_c=n((D, 2 * HD)),           # packed K|V for cross-attn
                  wo_c=n((HD, D)))
        return lp

    return dict(
        embed=n((V, D), 1.0, jnp.float32),
        lm_head=n((D, V)),
        enc_rel_bias=n((CFG["n_buckets"], H), 0.02, jnp.float32),
        dec_rel_bias=n((CFG["n_buckets"], H), 0.02, jnp.float32),
        enc_layers=[enc_layer() for _ in range(CFG["n_layers"])],
        dec_layers=[dec_layer() for _ in range(CFG["n_layers"])],
        enc_final_ln=jnp.ones((D,), jnp.float32),
        dec_final_ln=jnp.ones((D,), jnp.float32),
    )

# ----------------------------- main ------------------------------------------

if __name__ == "__main__":
    key = jax.random.PRNGKey(0)
    k_param, k_in, k_dec = jax.random.split(key, 3)

    B, S = 2, 8
    params = init_params(k_param)
    input_ids = jax.random.randint(k_in, (B, S), 0, CFG["vocab"], jnp.int32)
    attention_mask = jnp.ones((B, S), jnp.int32)
    decoder_input_ids = jax.random.randint(k_dec, (B, S), 0, CFG["vocab"],
                                           jnp.int32)

    fwd = jax.jit(t5_lm_forward)
    logits = fwd(params, input_ids, attention_mask, decoder_input_ids)
    logits = jax.block_until_ready(logits)
    assert logits.shape == (B, S, CFG["vocab"])
    assert bool(jnp.all(jnp.isfinite(logits)))
    print("KERNEL_OK")
</pallas_src>

<mosaic_0001>
module attributes {stable_mosaic.version = 11 : i64} {
  func.func @_self_attn_block_kernel(%arg0: i32, %arg1: memref<1x8x32xf32, #tpu.memory_space<vmem>>, %arg2: memref<1x32xf32, #tpu.memory_space<vmem>>, %arg3: memref<32x96xbf16, #tpu.memory_space<vmem>>, %arg4: memref<32x32xbf16, #tpu.memory_space<vmem>>, %arg5: memref<4x8x8xf32, #tpu.memory_space<vmem>>, %arg6: memref<1x1x8xf32, #tpu.memory_space<vmem>>, %arg7: memref<1x8x32xf32, #tpu.memory_space<vmem>>) attributes {dimension_semantics = [#tpu.dimension_semantics<parallel>], iteration_bounds = array<i64: 2>, scalar_prefetch = 0 : i64, scratch_operands = 0 : i64, tpu.core_type = #tpu.core_type<tc>, window_params = [{transform_indices = @transform_0, window_bounds = array<i64: 1, 8, 32>}, {pipeline_mode = #tpu.pipeline_mode<synchronous>, transform_indices = @transform_1, window_bounds = array<i64: 1, 32>}, {pipeline_mode = #tpu.pipeline_mode<synchronous>, transform_indices = @transform_2, window_bounds = array<i64: 32, 96>}, {pipeline_mode = #tpu.pipeline_mode<synchronous>, transform_indices = @transform_3, window_bounds = array<i64: 32, 32>}, {pipeline_mode = #tpu.pipeline_mode<synchronous>, transform_indices = @transform_4, window_bounds = array<i64: 4, 8, 8>}, {transform_indices = @transform_5, window_bounds = array<i64: 1, 1, 8>}, {transform_indices = @transform_6, window_bounds = array<i64: 1, 8, 32>}]} {
    %c0 = arith.constant 0 : index
    %c0_0 = arith.constant 0 : index
    %c0_1 = arith.constant 0 : index
    %0 = vector.load %arg1[%c0, %c0_0, %c0_1] : memref<1x8x32xf32, #tpu.memory_space<vmem>>, vector<1x8x32xf32>
    %1 = vector.shape_cast %0 : vector<1x8x32xf32> to vector<8x32xf32>
    %2 = arith.mulf %1, %1 : vector<8x32xf32>
    %cst = arith.constant dense<0.000000e+00> : vector<8xf32>
    %3 = vector.multi_reduction <add>, %2, %cst [1] : vector<8x32xf32> to vector<8xf32>
    %4 = vector.shape_cast %3 : vector<8xf32> to vector<8x1xf32>
    %cst_2 = arith.constant 3.200000e+01 : f32
    %5 = vector.broadcast %cst_2 : f32 to vector<8x1xf32>
    %6 = arith.divf %4, %5 : vector<8x1xf32>
    %cst_3 = arith.constant 9.99999997E-7 : f32
    %7 = vector.broadcast %cst_3 : f32 to vector<8x1xf32>
    %8 = arith.addf %6, %7 : vector<8x1xf32>
    %9 = math.rsqrt %8 : vector<8x1xf32>
    %10 = vector.broadcast %9 : vector<8x1xf32> to vector<8x32xf32>
    %11 = arith.mulf %1, %10 : vector<8x32xf32>
    %c0_4 = arith.constant 0 : index
    %c0_5 = arith.constant 0 : index
    %12 = vector.load %arg2[%c0_4, %c0_5] : memref<1x32xf32, #tpu.memory_space<vmem>>, vector<1x32xf32>
    %13 = vector.broadcast %12 : vector<1x32xf32> to vector<8x32xf32>
    %14 = arith.mulf %11, %13 : vector<8x32xf32>
    %15 = arith.truncf %14 : vector<8x32xf32> to vector<8x32xbf16>
    %c0_6 = arith.constant 0 : index
    %c0_7 = arith.constant 0 : index
    %16 = vector.load %arg3[%c0_6, %c0_7] : memref<32x96xbf16, #tpu.memory_space<vmem>>, vector<32x96xbf16>
    %cst_8 = arith.constant dense<0.000000e+00> : vector<8x96xf32>
    %17 = tpu.matmul %15, %16, %cst_8 {dimension_numbers = #tpu.dot_dimension_numbers<[1], [0], [0], [1], [0, 0, 1, 1], [], []>} : vector<8x32xbf16>, vector<32x96xbf16>, vector<8x96xf32> -> vector<8x96xf32>
    %c0_9 = arith.constant 0 : index
    %c0_10 = arith.constant 0 : index
    %c0_11 = arith.constant 0 : index
    %18 = vector.load %arg5[%c0_9, %c0_10, %c0_11] : memref<4x8x8xf32, #tpu.memory_space<vmem>>, vector<4x8x8xf32>
    %c0_12 = arith.constant 0 : index
    %c0_13 = arith.constant 0 : index
    %c0_14 = arith.constant 0 : index
    %19 = vector.load %arg6[%c0_12, %c0_13, %c0_14] : memref<1x1x8xf32, #tpu.memory_space<vmem>>, vector<1x1x8xf32>
    %20 = vector.shape_cast %19 : vector<1x1x8xf32> to vector<1x8xf32>
    %21 = vector.extract_strided_slice %17 {offsets = [0, 0], sizes = [8, 8], strides = [1, 1]} : vector<8x96xf32> to vector<8x8xf32>
    %22 = arith.truncf %21 : vector<8x8xf32> to vector<8x8xbf16>
    %23 = vector.extract_strided_slice %17 {offsets = [0, 32], sizes = [8, 8], strides = [1, 1]} : vector<8x96xf32> to vector<8x8xf32>
    %24 = arith.truncf %23 : vector<8x8xf32> to vector<8x8xbf16>
    %25 = vector.extract_strided_slice %17 {offsets = [0, 64], sizes = [8, 8], strides = [1, 1]} : vector<8x96xf32> to vector<8x8xf32>
    %26 = arith.truncf %25 : vector<8x8xf32> to vector<8x8xbf16>
    %cst_15 = arith.constant dense<0.000000e+00> : vector<8x8xf32>
    %27 = tpu.matmul %22, %24, %cst_15 {dimension_numbers = #tpu.dot_dimension_numbers<[1], [1], [0], [0], [0, 0, 1, 0], [], []>} : vector<8x8xbf16>, vector<8x8xbf16>, vector<8x8xf32> -> vector<8x8xf32>
    %28 = vector.extract_strided_slice %18 {offsets = [0, 0, 0], sizes = [1, 8, 8], strides = [1, 1, 1]} : vector<4x8x8xf32> to vector<1x8x8xf32>
    %29 = vector.shape_cast %28 : vector<1x8x8xf32> to vector<8x8xf32>
    %30 = arith.addf %27, %29 : vector<8x8xf32>
    %31 = vector.broadcast %20 : vector<1x8xf32> to vector<8x8xf32>
    %32 = arith.addf %30, %31 : vector<8x8xf32>
    %cst_16 = arith.constant dense<0xFF800000> : vector<8xf32>
    %33 = vector.multi_reduction <maximumf>, %32, %cst_16 [1] : vector<8x8xf32> to vector<8xf32>
    %34 = vector.shape_cast %33 : vector<8xf32> to vector<8x1xf32>
    %35 = vector.broadcast %34 : vector<8x1xf32> to vector<8x8xf32>
    %36 = arith.subf %32, %35 : vector<8x8xf32>
    %37 = math.exp %36 : vector<8x8xf32>
    %cst_17 = arith.constant dense<0.000000e+00> : vector<8xf32>
    %38 = vector.multi_reduction <add>, %37, %cst_17 [1] : vector<8x8xf32> to vector<8xf32>
    %39 = vector.shape_cast %38 : vector<8xf32> to vector<8x1xf32>
    %40 = tpu.reciprocal %39 {approx = true} : vector<8x1xf32> -> vector<8x1xf32>
    %41 = vector.broadcast %40 : vector<8x1xf32> to vector<8x8xf32>
    %42 = arith.mulf %37, %41 : vector<8x8xf32>
    %43 = arith.truncf %42 : vector<8x8xf32> to vector<8x8xbf16>
    %cst_18 = arith.constant dense<0.000000e+00> : vector<8x8xf32>
    %44 = tpu.matmul %43, %26, %cst_18 {dimension_numbers = #tpu.dot_dimension_numbers<[1], [0], [0], [1], [0, 0, 1, 1], [], []>} : vector<8x8xbf16>, vector<8x8xbf16>, vector<8x8xf32> -> vector<8x8xf32>
    %45 = vector.extract_strided_slice %17 {offsets = [0, 8], sizes = [8, 8], strides = [1, 1]} : vector<8x96xf32> to vector<8x8xf32>
    %46 = arith.truncf %45 : vector<8x8xf32> to vector<8x8xbf16>
    %47 = vector.extract_strided_slice %17 {offsets = [0, 40], sizes = [8, 8], strides = [1, 1]} : vector<8x96xf32> to vector<8x8xf32>
    %48 = arith.truncf %47 : vector<8x8xf32> to vector<8x8xbf16>
    %49 = vector.extract_strided_slice %17 {offsets = [0, 72], sizes = [8, 8], strides = [1, 1]} : vector<8x96xf32> to vector<8x8xf32>
    %50 = arith.truncf %49 : vector<8x8xf32> to vector<8x8xbf16>
    %cst_19 = arith.constant dense<0.000000e+00> : vector<8x8xf32>
    %51 = tpu.matmul %46, %48, %cst_19 {dimension_numbers = #tpu.dot_dimension_numbers<[1], [1], [0], [0], [0, 0, 1, 0], [], []>} : vector<8x8xbf16>, vector<8x8xbf16>, vector<8x8xf32> -> vector<8x8xf32>
    %52 = vector.extract_strided_slice %18 {offsets = [1, 0, 0], sizes = [1, 8, 8], strides = [1, 1, 1]} : vector<4x8x8xf32> to vector<1x8x8xf32>
    %53 = vector.shape_cast %52 : vector<1x8x8xf32> to vector<8x8xf32>
    %54 = arith.addf %51, %53 : vector<8x8xf32>
    %55 = vector.broadcast %20 : vector<1x8xf32> to vector<8x8xf32>
    %56 = arith.addf %54, %55 : vector<8x8xf32>
    %cst_20 = arith.constant dense<0xFF800000> : vector<8xf32>
    %57 = vector.multi_reduction <maximumf>, %56, %cst_20 [1] : vector<8x8xf32> to vector<8xf32>
    %58 = vector.shape_cast %57 : vector<8xf32> to vector<8x1xf32>
    %59 = vector.broadcast %58 : vector<8x1xf32> to vector<8x8xf32>
    %60 = arith.subf %56, %59 : vector<8x8xf32>
    %61 = math.exp %60 : vector<8x8xf32>
    %cst_21 = arith.constant dense<0.000000e+00> : vector<8xf32>
    %62 = vector.multi_reduction <add>, %61, %cst_21 [1] : vector<8x8xf32> to vector<8xf32>
    %63 = vector.shape_cast %62 : vector<8xf32> to vector<8x1xf32>
    %64 = tpu.reciprocal %63 {approx = true} : vector<8x1xf32> -> vector<8x1xf32>
    %65 = vector.broadcast %64 : vector<8x1xf32> to vector<8x8xf32>
    %66 = arith.mulf %61, %65 : vector<8x8xf32>
    %67 = arith.truncf %66 : vector<8x8xf32> to vector<8x8xbf16>
    %cst_22 = arith.constant dense<0.000000e+00> : vector<8x8xf32>
    %68 = tpu.matmul %67, %50, %cst_22 {dimension_numbers = #tpu.dot_dimension_numbers<[1], [0], [0], [1], [0, 0, 1, 1], [], []>} : vector<8x8xbf16>, vector<8x8xbf16>, vector<8x8xf32> -> vector<8x8xf32>
    %69 = vector.extract_strided_slice %17 {offsets = [0, 16], sizes = [8, 8], strides = [1, 1]} : vector<8x96xf32> to vector<8x8xf32>
    %70 = arith.truncf %69 : vector<8x8xf32> to vector<8x8xbf16>
    %71 = vector.extract_strided_slice %17 {offsets = [0, 48], sizes = [8, 8], strides = [1, 1]} : vector<8x96xf32> to vector<8x8xf32>
    %72 = arith.truncf %71 : vector<8x8xf32> to vector<8x8xbf16>
    %73 = vector.extract_strided_slice %17 {offsets = [0, 80], sizes = [8, 8], strides = [1, 1]} : vector<8x96xf32> to vector<8x8xf32>
    %74 = arith.truncf %73 : vector<8x8xf32> to vector<8x8xbf16>
    %cst_23 = arith.constant dense<0.000000e+00> : vector<8x8xf32>
    %75 = tpu.matmul %70, %72, %cst_23 {dimension_numbers = #tpu.dot_dimension_numbers<[1], [1], [0], [0], [0, 0, 1, 0], [], []>} : vector<8x8xbf16>, vector<8x8xbf16>, vector<8x8xf32> -> vector<8x8xf32>
    %76 = vector.extract_strided_slice %18 {offsets = [2, 0, 0], sizes = [1, 8, 8], strides = [1, 1, 1]} : vector<4x8x8xf32> to vector<1x8x8xf32>
    %77 = vector.shape_cast %76 : vector<1x8x8xf32> to vector<8x8xf32>
    %78 = arith.addf %75, %77 : vector<8x8xf32>
    %79 = vector.broadcast %20 : vector<1x8xf32> to vector<8x8xf32>
    %80 = arith.addf %78, %79 : vector<8x8xf32>
    %cst_24 = arith.constant dense<0xFF800000> : vector<8xf32>
    %81 = vector.multi_reduction <maximumf>, %80, %cst_24 [1] : vector<8x8xf32> to vector<8xf32>
    %82 = vector.shape_cast %81 : vector<8xf32> to vector<8x1xf32>
    %83 = vector.broadcast %82 : vector<8x1xf32> to vector<8x8xf32>
    %84 = arith.subf %80, %83 : vector<8x8xf32>
    %85 = math.exp %84 : vector<8x8xf32>
    %cst_25 = arith.constant dense<0.000000e+00> : vector<8xf32>
    %86 = vector.multi_reduction <add>, %85, %cst_25 [1] : vector<8x8xf32> to vector<8xf32>
    %87 = vector.shape_cast %86 : vector<8xf32> to vector<8x1xf32>
    %88 = tpu.reciprocal %87 {approx = true} : vector<8x1xf32> -> vector<8x1xf32>
    %89 = vector.broadcast %88 : vector<8x1xf32> to vector<8x8xf32>
    %90 = arith.mulf %85, %89 : vector<8x8xf32>
    %91 = arith.truncf %90 : vector<8x8xf32> to vector<8x8xbf16>
    %cst_26 = arith.constant dense<0.000000e+00> : vector<8x8xf32>
    %92 = tpu.matmul %91, %74, %cst_26 {dimension_numbers = #tpu.dot_dimension_numbers<[1], [0], [0], [1], [0, 0, 1, 1], [], []>} : vector<8x8xbf16>, vector<8x8xbf16>, vector<8x8xf32> -> vector<8x8xf32>
    %93 = vector.extract_strided_slice %17 {offsets = [0, 24], sizes = [8, 8], strides = [1, 1]} : vector<8x96xf32> to vector<8x8xf32>
    %94 = arith.truncf %93 : vector<8x8xf32> to vector<8x8xbf16>
    %95 = vector.extract_strided_slice %17 {offsets = [0, 56], sizes = [8, 8], strides = [1, 1]} : vector<8x96xf32> to vector<8x8xf32>
    %96 = arith.truncf %95 : vector<8x8xf32> to vector<8x8xbf16>
    %97 = vector.extract_strided_slice %17 {offsets = [0, 88], sizes = [8, 8], strides = [1, 1]} : vector<8x96xf32> to vector<8x8xf32>
    %98 = arith.truncf %97 : vector<8x8xf32> to vector<8x8xbf16>
    %cst_27 = arith.constant dense<0.000000e+00> : vector<8x8xf32>
    %99 = tpu.matmul %94, %96, %cst_27 {dimension_numbers = #tpu.dot_dimension_numbers<[1], [1], [0], [0], [0, 0, 1, 0], [], []>} : vector<8x8xbf16>, vector<8x8xbf16>, vector<8x8xf32> -> vector<8x8xf32>
    %100 = vector.extract_strided_slice %18 {offsets = [3, 0, 0], sizes = [1, 8, 8], strides = [1, 1, 1]} : vector<4x8x8xf32> to vector<1x8x8xf32>
    %101 = vector.shape_cast %100 : vector<1x8x8xf32> to vector<8x8xf32>
    %102 = arith.addf %99, %101 : vector<8x8xf32>
    %103 = vector.broadcast %20 : vector<1x8xf32> to vector<8x8xf32>
    %104 = arith.addf %102, %103 : vector<8x8xf32>
    %cst_28 = arith.constant dense<0xFF800000> : vector<8xf32>
    %105 = vector.multi_reduction <maximumf>, %104, %cst_28 [1] : vector<8x8xf32> to vector<8xf32>
    %106 = vector.shape_cast %105 : vector<8xf32> to vector<8x1xf32>
    %107 = vector.broadcast %106 : vector<8x1xf32> to vector<8x8xf32>
    %108 = arith.subf %104, %107 : vector<8x8xf32>
    %109 = math.exp %108 : vector<8x8xf32>
    %cst_29 = arith.constant dense<0.000000e+00> : vector<8xf32>
    %110 = vector.multi_reduction <add>, %109, %cst_29 [1] : vector<8x8xf32> to vector<8xf32>
    %111 = vector.shape_cast %110 : vector<8xf32> to vector<8x1xf32>
    %112 = tpu.reciprocal %111 {approx = true} : vector<8x1xf32> -> vector<8x1xf32>
    %113 = vector.broadcast %112 : vector<8x1xf32> to vector<8x8xf32>
    %114 = arith.mulf %109, %113 : vector<8x8xf32>
    %115 = arith.truncf %114 : vector<8x8xf32> to vector<8x8xbf16>
    %cst_30 = arith.constant dense<0.000000e+00> : vector<8x8xf32>
    %116 = tpu.matmul %115, %98, %cst_30 {dimension_numbers = #tpu.dot_dimension_numbers<[1], [0], [0], [1], [0, 0, 1, 1], [], []>} : vector<8x8xbf16>, vector<8x8xbf16>, vector<8x8xf32> -> vector<8x8xf32>
    %117 = tpu.concatenate %44, %68, %92, %116 in 1 : vector<8x8xf32>, vector<8x8xf32>, vector<8x8xf32>, vector<8x8xf32> -> vector<8x32xf32>
    %118 = arith.truncf %117 : vector<8x32xf32> to vector<8x32xbf16>
    %c0_31 = arith.constant 0 : index
    %c0_32 = arith.constant 0 : index
    %119 = vector.load %arg4[%c0_31, %c0_32] : memref<32x32xbf16, #tpu.memory_space<vmem>>, vector<32x32xbf16>
    %cst_33 = arith.constant dense<0.000000e+00> : vector<8x32xf32>
    %120 = tpu.matmul %118, %119, %cst_33 {dimension_numbers = #tpu.dot_dimension_numbers<[1], [0], [0], [1], [0, 0, 1, 1], [], []>} : vector<8x32xbf16>, vector<32x32xbf16>, vector<8x32xf32> -> vector<8x32xf32>
    %121 = arith.addf %1, %120 : vector<8x32xf32>
    %c0_34 = arith.constant 0 : index
    %c0_35 = arith.constant 0 : index
    %c0_36 = arith.constant 0 : index
    %122 = vector.load %arg7[%c0_34, %c0_35, %c0_36] : memref<1x8x32xf32, #tpu.memory_space<vmem>>, vector<1x8x32xf32>
    %123 = vector.shape_cast %122 : vector<1x8x32xf32> to vector<8x32xf32>
    %124 = vector.shape_cast %121 : vector<8x32xf32> to vector<1x8x32xf32>
    tpu.vector_store %arg7[%c0_34, %c0_35, %c0_36], %124 {strides = array<i32>} : memref<1x8x32xf32, #tpu.memory_space<vmem>>, vector<1x8x32xf32>,
    return
  }
  func.func @transform_0(%arg0: i32) -> (i32, i32, i32) {
    %c0_i32 = arith.constant 0 : i32
    %c0_i32_0 = arith.constant 0 : i32
    %c0_i32_1 = arith.constant 0 : i32
    return %arg0, %c0_i32, %c0_i32_0 : i32, i32, i32
  }
  func.func @transform_1(%arg0: i32) -> (i32, i32) {
    %c0_i32 = arith.constant 0 : i32
    %c0_i32_0 = arith.constant 0 : i32
    %c0_i32_1 = arith.constant 0 : i32
    return %c0_i32, %c0_i32_0 : i32, i32
  }
  func.func @transform_2(%arg0: i32) -> (i32, i32) {
    %c0_i32 = arith.constant 0 : i32
    %c0_i32_0 = arith.constant 0 : i32
    %c0_i32_1 = arith.constant 0 : i32
    return %c0_i32, %c0_i32_0 : i32, i32
  }
  func.func @transform_3(%arg0: i32) -> (i32, i32) {
    %c0_i32 = arith.constant 0 : i32
    %c0_i32_0 = arith.constant 0 : i32
    %c0_i32_1 = arith.constant 0 : i32
    return %c0_i32, %c0_i32_0 : i32, i32
  }
  func.func @transform_4(%arg0: i32) -> (i32, i32, i32) {
    %c0_i32 = arith.constant 0 : i32
    %c0_i32_0 = arith.constant 0 : i32
    %c0_i32_1 = arith.constant 0 : i32
    %c0_i32_2 = arith.constant 0 : i32
    return %c0_i32, %c0_i32_0, %c0_i32_1 : i32, i32, i32
  }
  func.func @transform_5(%arg0: i32) -> (i32, i32, i32) {
    %c0_i32 = arith.constant 0 : i32
    %c0_i32_0 = arith.constant 0 : i32
    %c0_i32_1 = arith.constant 0 : i32
    return %arg0, %c0_i32, %c0_i32_0 : i32, i32, i32
  }
  func.func @transform_6(%arg0: i32) -> (i32, i32, i32) {
    %c0_i32 = arith.constant 0 : i32
    %c0_i32_0 = arith.constant 0 : i32
    %c0_i32_1 = arith.constant 0 : i32
    return %arg0, %c0_i32, %c0_i32_0 : i32, i32, i32
  }
}

module attributes {stable_mosaic.version = 11 : i64} {
  func.func @_ffn_block_kernel(%arg0: i32, %arg1: memref<8x32xf32, #tpu.memory_space<vmem>>, %arg2: memref<1x32xf32, #tpu.memory_space<vmem>>, %arg3: memref<32x128xbf16, #tpu.memory_space<vmem>>, %arg4: memref<64x32xbf16, #tpu.memory_space<vmem>>, %arg5: memref<8x32xf32, #tpu.memory_space<vmem>>) attributes {dimension_semantics = [#tpu.dimension_semantics<parallel>], iteration_bounds = array<i64: 2>, scalar_prefetch = 0 : i64, scratch_operands = 0 : i64, tpu.core_type = #tpu.core_type<tc>, window_params = [{transform_indices = @transform_0, window_bounds = array<i64: 8, 32>}, {pipeline_mode = #tpu.pipeline_mode<synchronous>, transform_indices = @transform_1, window_bounds = array<i64: 1, 32>}, {pipeline_mode = #tpu.pipeline_mode<synchronous>, transform_indices = @transform_2, window_bounds = array<i64: 32, 128>}, {pipeline_mode = #tpu.pipeline_mode<synchronous>, transform_indices = @transform_3, window_bounds = array<i64: 64, 32>}, {transform_indices = @transform_4, window_bounds = array<i64: 8, 32>}]} {
    %c0 = arith.constant 0 : index
    %c0_0 = arith.constant 0 : index
    %0 = vector.load %arg1[%c0, %c0_0] : memref<8x32xf32, #tpu.memory_space<vmem>>, vector<8x32xf32>
    %1 = arith.mulf %0, %0 : vector<8x32xf32>
    %cst = arith.constant dense<0.000000e+00> : vector<8xf32>
    %2 = vector.multi_reduction <add>, %1, %cst [1] : vector<8x32xf32> to vector<8xf32>
    %3 = vector.shape_cast %2 : vector<8xf32> to vector<8x1xf32>
    %cst_1 = arith.constant 3.200000e+01 : f32
    %4 = vector.broadcast %cst_1 : f32 to vector<8x1xf32>
    %5 = arith.divf %3, %4 : vector<8x1xf32>
    %cst_2 = arith.constant 9.99999997E-7 : f32
    %6 = vector.broadcast %cst_2 : f32 to vector<8x1xf32>
    %7 = arith.addf %5, %6 : vector<8x1xf32>
    %8 = math.rsqrt %7 : vector<8x1xf32>
    %9 = vector.broadcast %8 : vector<8x1xf32> to vector<8x32xf32>
    %10 = arith.mulf %0, %9 : vector<8x32xf32>
    %c0_3 = arith.constant 0 : index
    %c0_4 = arith.constant 0 : index
    %11 = vector.load %arg2[%c0_3, %c0_4] : memref<1x32xf32, #tpu.memory_space<vmem>>, vector<1x32xf32>
    %12 = vector.broadcast %11 : vector<1x32xf32> to vector<8x32xf32>
    %13 = arith.mulf %10, %12 : vector<8x32xf32>
    %14 = arith.truncf %13 : vector<8x32xf32> to vector<8x32xbf16>
    %c0_5 = arith.constant 0 : index
    %c0_6 = arith.constant 0 : index
    %15 = vector.load %arg3[%c0_5, %c0_6] : memref<32x128xbf16, #tpu.memory_space<vmem>>, vector<32x128xbf16>
    %cst_7 = arith.constant dense<0.000000e+00> : vector<8x128xf32>
    %16 = tpu.matmul %14, %15, %cst_7 {dimension_numbers = #tpu.dot_dimension_numbers<[1], [0], [0], [1], [0, 0, 1, 1], [], []>} : vector<8x32xbf16>, vector<32x128xbf16>, vector<8x128xf32> -> vector<8x128xf32>
    %17 = vector.extract_strided_slice %16 {offsets = [0, 0], sizes = [8, 64], strides = [1, 1]} : vector<8x128xf32> to vector<8x64xf32>
    %18 = vector.extract_strided_slice %16 {offsets = [0, 64], sizes = [8, 64], strides = [1, 1]} : vector<8x128xf32> to vector<8x64xf32>
    %cst_8 = arith.constant 5.000000e-01 : f32
    %19 = vector.broadcast %cst_8 : f32 to vector<8x64xf32>
    %20 = arith.mulf %19, %17 : vector<8x64xf32>
    %cst_9 = arith.constant 4.471500e-02 : f32
    %21 = vector.broadcast %cst_9 : f32 to vector<8x64xf32>
    %22 = arith.mulf %21, %17 : vector<8x64xf32>
    %23 = arith.mulf %22, %17 : vector<8x64xf32>
    %24 = arith.mulf %23, %17 : vector<8x64xf32>
    %25 = arith.addf %17, %24 : vector<8x64xf32>
    %cst_10 = arith.constant 0.797884583 : f32
    %26 = vector.broadcast %cst_10 : f32 to vector<8x64xf32>
    %27 = arith.mulf %26, %25 : vector<8x64xf32>
    %28 = math.tanh %27 : vector<8x64xf32>
    %cst_11 = arith.constant 1.000000e+00 : f32
    %29 = vector.broadcast %cst_11 : f32 to vector<8x64xf32>
    %30 = arith.addf %29, %28 : vector<8x64xf32>
    %31 = arith.mulf %20, %30 : vector<8x64xf32>
    %32 = arith.mulf %31, %18 : vector<8x64xf32>
    %33 = arith.truncf %32 : vector<8x64xf32> to vector<8x64xbf16>
    %c0_12 = arith.constant 0 : index
    %c0_13 = arith.constant 0 : index
    %34 = vector.load %arg4[%c0_12, %c0_13] : memref<64x32xbf16, #tpu.memory_space<vmem>>, vector<64x32xbf16>
    %cst_14 = arith.constant dense<0.000000e+00> : vector<8x32xf32>
    %35 = tpu.matmul %33, %34, %cst_14 {dimension_numbers = #tpu.dot_dimension_numbers<[1], [0], [0], [1], [0, 0, 1, 1], [], []>} : vector<8x64xbf16>, vector<64x32xbf16>, vector<8x32xf32> -> vector<8x32xf32>
    %36 = arith.addf %0, %35 : vector<8x32xf32>
    %c0_15 = arith.constant 0 : index
    %c0_16 = arith.constant 0 : index
    %37 = vector.load %arg5[%c0_15, %c0_16] : memref<8x32xf32, #tpu.memory_space<vmem>>, vector<8x32xf32>
    tpu.vector_store %arg5[%c0_15, %c0_16], %36 {strides = array<i32>} : memref<8x32xf32, #tpu.memory_space<vmem>>, vector<8x32xf32>,
    return
  }
  func.func @transform_0(%arg0: i32) -> (i32, i32) {
    %c0_i32 = arith.constant 0 : i32
    %c0_i32_0 = arith.constant 0 : i32
    return %arg0, %c0_i32 : i32, i32
  }
  func.func @transform_1(%arg0: i32) -> (i32, i32) {
    %c0_i32 = arith.constant 0 : i32
    %c0_i32_0 = arith.constant 0 : i32
    %c0_i32_1 = arith.constant 0 : i32
    return %c0_i32, %c0_i32_0 : i32, i32
  }
  func.func @transform_2(%arg0: i32) -> (i32, i32) {
    %c0_i32 = arith.constant 0 : i32
    %c0_i32_0 = arith.constant 0 : i32
    %c0_i32_1 = arith.constant 0 : i32
    return %c0_i32, %c0_i32_0 : i32, i32
  }
  func.func @transform_3(%arg0: i32) -> (i32, i32) {
    %c0_i32 = arith.constant 0 : i32
    %c0_i32_0 = arith.constant 0 : i32
    %c0_i32_1 = arith.constant 0 : i32
    return %c0_i32, %c0_i32_0 : i32, i32
  }
  func.func @transform_4(%arg0: i32) -> (i32, i32) {
    %c0_i32 = arith.constant 0 : i32
    %c0_i32_0 = arith.constant 0 : i32
    return %arg0, %c0_i32 : i32, i32
  }
}

module attributes {stable_mosaic.version = 11 : i64} {
  func.func @_rmsnorm_kernel(%arg0: i32, %arg1: memref<16x32xf32, #tpu.memory_space<vmem>>, %arg2: memref<1x32xf32, #tpu.memory_space<vmem>>, %arg3: memref<16x32xf32, #tpu.memory_space<vmem>>) attributes {dimension_semantics = [#tpu.dimension_semantics<arbitrary>], iteration_bounds = array<i64: 1>, scalar_prefetch = 0 : i64, scratch_operands = 0 : i64, tpu.core_type = #tpu.core_type<tc>, window_params = [{pipeline_mode = #tpu.pipeline_mode<synchronous>, transform_indices = @transform_0, window_bounds = array<i64: 16, 32>}, {pipeline_mode = #tpu.pipeline_mode<synchronous>, transform_indices = @transform_1, window_bounds = array<i64: 1, 32>}, {pipeline_mode = #tpu.pipeline_mode<synchronous>, transform_indices = @transform_2, window_bounds = array<i64: 16, 32>}]} {
    %c0 = arith.constant 0 : index
    %c0_0 = arith.constant 0 : index
    %0 = vector.load %arg1[%c0, %c0_0] : memref<16x32xf32, #tpu.memory_space<vmem>>, vector<16x32xf32>
    %1 = arith.mulf %0, %0 : vector<16x32xf32>
    %cst = arith.constant dense<0.000000e+00> : vector<16xf32>
    %2 = vector.multi_reduction <add>, %1, %cst [1] : vector<16x32xf32> to vector<16xf32>
    %3 = vector.shape_cast %2 : vector<16xf32> to vector<16x1xf32>
    %cst_1 = arith.constant 3.200000e+01 : f32
    %4 = vector.broadcast %cst_1 : f32 to vector<16x1xf32>
    %5 = arith.divf %3, %4 : vector<16x1xf32>
    %cst_2 = arith.constant 9.99999997E-7 : f32
    %6 = vector.broadcast %cst_2 : f32 to vector<16x1xf32>
    %7 = arith.addf %5, %6 : vector<16x1xf32>
    %8 = math.rsqrt %7 : vector<16x1xf32>
    %9 = vector.broadcast %8 : vector<16x1xf32> to vector<16x32xf32>
    %10 = arith.mulf %0, %9 : vector<16x32xf32>
    %c0_3 = arith.constant 0 : index
    %c0_4 = arith.constant 0 : index
    %11 = vector.load %arg2[%c0_3, %c0_4] : memref<1x32xf32, #tpu.memory_space<vmem>>, vector<1x32xf32>
    %12 = vector.broadcast %11 : vector<1x32xf32> to vector<16x32xf32>
    %13 = arith.mulf %10, %12 : vector<16x32xf32>
    %c0_5 = arith.constant 0 : index
    %c0_6 = arith.constant 0 : index
    %14 = vector.load %arg3[%c0_5, %c0_6] : memref<16x32xf32, #tpu.memory_space<vmem>>, vector<16x32xf32>
    tpu.vector_store %arg3[%c0_5, %c0_6], %13 {strides = array<i32>} : memref<16x32xf32, #tpu.memory_space<vmem>>, vector<16x32xf32>,
    return
  }
  func.func @transform_0(%arg0: i32) -> (i32, i32) {
    %c0_i32 = arith.constant 0 : i32
    %c0_i32_0 = arith.constant 0 : i32
    %c0_i32_1 = arith.constant 0 : i32
    return %c0_i32, %c0_i32_0 : i32, i32
  }
  func.func @transform_1(%arg0: i32) -> (i32, i32) {
    %c0_i32 = arith.constant 0 : i32
    %c0_i32_0 = arith.constant 0 : i32
    %c0_i32_1 = arith.constant 0 : i32
    return %c0_i32, %c0_i32_0 : i32, i32
  }
  func.func @transform_2(%arg0: i32) -> (i32, i32) {
    %c0_i32 = arith.constant 0 : i32
    %c0_i32_0 = arith.constant 0 : i32
    %c0_i32_1 = arith.constant 0 : i32
    return %c0_i32, %c0_i32_0 : i32, i32
  }
}

module attributes {stable_mosaic.version = 11 : i64} {
  func.func @_cross_attn_block_kernel(%arg0: i32, %arg1: memref<1x8x32xf32, #tpu.memory_space<vmem>>, %arg2: memref<1x8x32xf32, #tpu.memory_space<vmem>>, %arg3: memref<1x32xf32, #tpu.memory_space<vmem>>, %arg4: memref<32x32xbf16, #tpu.memory_space<vmem>>, %arg5: memref<32x64xbf16, #tpu.memory_space<vmem>>, %arg6: memref<32x32xbf16, #tpu.memory_space<vmem>>, %arg7: memref<1x1x8xf32, #tpu.memory_space<vmem>>, %arg8: memref<1x8x32xf32, #tpu.memory_space<vmem>>) attributes {dimension_semantics = [#tpu.dimension_semantics<parallel>], iteration_bounds = array<i64: 2>, scalar_prefetch = 0 : i64, scratch_operands = 0 : i64, tpu.core_type = #tpu.core_type<tc>, window_params = [{transform_indices = @transform_0, window_bounds = array<i64: 1, 8, 32>}, {transform_indices = @transform_1, window_bounds = array<i64: 1, 8, 32>}, {pipeline_mode = #tpu.pipeline_mode<synchronous>, transform_indices = @transform_2, window_bounds = array<i64: 1, 32>}, {pipeline_mode = #tpu.pipeline_mode<synchronous>, transform_indices = @transform_3, window_bounds = array<i64: 32, 32>}, {pipeline_mode = #tpu.pipeline_mode<synchronous>, transform_indices = @transform_4, window_bounds = array<i64: 32, 64>}, {pipeline_mode = #tpu.pipeline_mode<synchronous>, transform_indices = @transform_5, window_bounds = array<i64: 32, 32>}, {transform_indices = @transform_6, window_bounds = array<i64: 1, 1, 8>}, {transform_indices = @transform_7, window_bounds = array<i64: 1, 8, 32>}]} {
    %c0 = arith.constant 0 : index
    %c0_0 = arith.constant 0 : index
    %c0_1 = arith.constant 0 : index
    %0 = vector.load %arg1[%c0, %c0_0, %c0_1] : memref<1x8x32xf32, #tpu.memory_space<vmem>>, vector<1x8x32xf32>
    %1 = vector.shape_cast %0 : vector<1x8x32xf32> to vector<8x32xf32>
    %c0_2 = arith.constant 0 : index
    %c0_3 = arith.constant 0 : index
    %c0_4 = arith.constant 0 : index
    %2 = vector.load %arg2[%c0_2, %c0_3, %c0_4] : memref<1x8x32xf32, #tpu.memory_space<vmem>>, vector<1x8x32xf32>
    %3 = vector.shape_cast %2 : vector<1x8x32xf32> to vector<8x32xf32>
    %4 = arith.truncf %3 : vector<8x32xf32> to vector<8x32xbf16>
    %5 = arith.mulf %1, %1 : vector<8x32xf32>
    %cst = arith.constant dense<0.000000e+00> : vector<8xf32>
    %6 = vector.multi_reduction <add>, %5, %cst [1] : vector<8x32xf32> to vector<8xf32>
    %7 = vector.shape_cast %6 : vector<8xf32> to vector<8x1xf32>
    %cst_5 = arith.constant 3.200000e+01 : f32
    %8 = vector.broadcast %cst_5 : f32 to vector<8x1xf32>
    %9 = arith.divf %7, %8 : vector<8x1xf32>
    %cst_6 = arith.constant 9.99999997E-7 : f32
    %10 = vector.broadcast %cst_6 : f32 to vector<8x1xf32>
    %11 = arith.addf %9, %10 : vector<8x1xf32>
    %12 = math.rsqrt %11 : vector<8x1xf32>
    %13 = vector.broadcast %12 : vector<8x1xf32> to vector<8x32xf32>
    %14 = arith.mulf %1, %13 : vector<8x32xf32>
    %c0_7 = arith.constant 0 : index
    %c0_8 = arith.constant 0 : index
    %15 = vector.load %arg3[%c0_7, %c0_8] : memref<1x32xf32, #tpu.memory_space<vmem>>, vector<1x32xf32>
    %16 = vector.broadcast %15 : vector<1x32xf32> to vector<8x32xf32>
    %17 = arith.mulf %14, %16 : vector<8x32xf32>
    %18 = arith.truncf %17 : vector<8x32xf32> to vector<8x32xbf16>
    %c0_9 = arith.constant 0 : index
    %c0_10 = arith.constant 0 : index
    %19 = vector.load %arg4[%c0_9, %c0_10] : memref<32x32xbf16, #tpu.memory_space<vmem>>, vector<32x32xbf16>
    %cst_11 = arith.constant dense<0.000000e+00> : vector<8x32xf32>
    %20 = tpu.matmul %18, %19, %cst_11 {dimension_numbers = #tpu.dot_dimension_numbers<[1], [0], [0], [1], [0, 0, 1, 1], [], []>} : vector<8x32xbf16>, vector<32x32xbf16>, vector<8x32xf32> -> vector<8x32xf32>
    %c0_12 = arith.constant 0 : index
    %c0_13 = arith.constant 0 : index
    %21 = vector.load %arg5[%c0_12, %c0_13] : memref<32x64xbf16, #tpu.memory_space<vmem>>, vector<32x64xbf16>
    %cst_14 = arith.constant dense<0.000000e+00> : vector<8x64xf32>
    %22 = tpu.matmul %4, %21, %cst_14 {dimension_numbers = #tpu.dot_dimension_numbers<[1], [0], [0], [1], [0, 0, 1, 1], [], []>} : vector<8x32xbf16>, vector<32x64xbf16>, vector<8x64xf32> -> vector<8x64xf32>
    %c0_15 = arith.constant 0 : index
    %c0_16 = arith.constant 0 : index
    %c0_17 = arith.constant 0 : index
    %23 = vector.load %arg7[%c0_15, %c0_16, %c0_17] : memref<1x1x8xf32, #tpu.memory_space<vmem>>, vector<1x1x8xf32>
    %24 = vector.shape_cast %23 : vector<1x1x8xf32> to vector<1x8xf32>
    %25 = vector.extract_strided_slice %20 {offsets = [0, 0], sizes = [8, 8], strides = [1, 1]} : vector<8x32xf32> to vector<8x8xf32>
    %26 = arith.truncf %25 : vector<8x8xf32> to vector<8x8xbf16>
    %27 = vector.extract_strided_slice %22 {offsets = [0, 0], sizes = [8, 8], strides = [1, 1]} : vector<8x64xf32> to vector<8x8xf32>
    %28 = arith.truncf %27 : vector<8x8xf32> to vector<8x8xbf16>
    %29 = vector.extract_strided_slice %22 {offsets = [0, 32], sizes = [8, 8], strides = [1, 1]} : vector<8x64xf32> to vector<8x8xf32>
    %30 = arith.truncf %29 : vector<8x8xf32> to vector<8x8xbf16>
    %cst_18 = arith.constant dense<0.000000e+00> : vector<8x8xf32>
    %31 = tpu.matmul %26, %28, %cst_18 {dimension_numbers = #tpu.dot_dimension_numbers<[1], [1], [0], [0], [0, 0, 1, 0], [], []>} : vector<8x8xbf16>, vector<8x8xbf16>, vector<8x8xf32> -> vector<8x8xf32>
    %32 = vector.broadcast %24 : vector<1x8xf32> to vector<8x8xf32>
    %33 = arith.addf %31, %32 : vector<8x8xf32>
    %cst_19 = arith.constant dense<0xFF800000> : vector<8xf32>
    %34 = vector.multi_reduction <maximumf>, %33, %cst_19 [1] : vector<8x8xf32> to vector<8xf32>
    %35 = vector.shape_cast %34 : vector<8xf32> to vector<8x1xf32>
    %36 = vector.broadcast %35 : vector<8x1xf32> to vector<8x8xf32>
    %37 = arith.subf %33, %36 : vector<8x8xf32>
    %38 = math.exp %37 : vector<8x8xf32>
    %cst_20 = arith.constant dense<0.000000e+00> : vector<8xf32>
    %39 = vector.multi_reduction <add>, %38, %cst_20 [1] : vector<8x8xf32> to vector<8xf32>
    %40 = vector.shape_cast %39 : vector<8xf32> to vector<8x1xf32>
    %41 = tpu.reciprocal %40 {approx = true} : vector<8x1xf32> -> vector<8x1xf32>
    %42 = vector.broadcast %41 : vector<8x1xf32> to vector<8x8xf32>
    %43 = arith.mulf %38, %42 : vector<8x8xf32>
    %44 = arith.truncf %43 : vector<8x8xf32> to vector<8x8xbf16>
    %cst_21 = arith.constant dense<0.000000e+00> : vector<8x8xf32>
    %45 = tpu.matmul %44, %30, %cst_21 {dimension_numbers = #tpu.dot_dimension_numbers<[1], [0], [0], [1], [0, 0, 1, 1], [], []>} : vector<8x8xbf16>, vector<8x8xbf16>, vector<8x8xf32> -> vector<8x8xf32>
    %46 = vector.extract_strided_slice %20 {offsets = [0, 8], sizes = [8, 8], strides = [1, 1]} : vector<8x32xf32> to vector<8x8xf32>
    %47 = arith.truncf %46 : vector<8x8xf32> to vector<8x8xbf16>
    %48 = vector.extract_strided_slice %22 {offsets = [0, 8], sizes = [8, 8], strides = [1, 1]} : vector<8x64xf32> to vector<8x8xf32>
    %49 = arith.truncf %48 : vector<8x8xf32> to vector<8x8xbf16>
    %50 = vector.extract_strided_slice %22 {offsets = [0, 40], sizes = [8, 8], strides = [1, 1]} : vector<8x64xf32> to vector<8x8xf32>
    %51 = arith.truncf %50 : vector<8x8xf32> to vector<8x8xbf16>
    %cst_22 = arith.constant dense<0.000000e+00> : vector<8x8xf32>
    %52 = tpu.matmul %47, %49, %cst_22 {dimension_numbers = #tpu.dot_dimension_numbers<[1], [1], [0], [0], [0, 0, 1, 0], [], []>} : vector<8x8xbf16>, vector<8x8xbf16>, vector<8x8xf32> -> vector<8x8xf32>
    %53 = vector.broadcast %24 : vector<1x8xf32> to vector<8x8xf32>
    %54 = arith.addf %52, %53 : vector<8x8xf32>
    %cst_23 = arith.constant dense<0xFF800000> : vector<8xf32>
    %55 = vector.multi_reduction <maximumf>, %54, %cst_23 [1] : vector<8x8xf32> to vector<8xf32>
    %56 = vector.shape_cast %55 : vector<8xf32> to vector<8x1xf32>
    %57 = vector.broadcast %56 : vector<8x1xf32> to vector<8x8xf32>
    %58 = arith.subf %54, %57 : vector<8x8xf32>
    %59 = math.exp %58 : vector<8x8xf32>
    %cst_24 = arith.constant dense<0.000000e+00> : vector<8xf32>
    %60 = vector.multi_reduction <add>, %59, %cst_24 [1] : vector<8x8xf32> to vector<8xf32>
    %61 = vector.shape_cast %60 : vector<8xf32> to vector<8x1xf32>
    %62 = tpu.reciprocal %61 {approx = true} : vector<8x1xf32> -> vector<8x1xf32>
    %63 = vector.broadcast %62 : vector<8x1xf32> to vector<8x8xf32>
    %64 = arith.mulf %59, %63 : vector<8x8xf32>
    %65 = arith.truncf %64 : vector<8x8xf32> to vector<8x8xbf16>
    %cst_25 = arith.constant dense<0.000000e+00> : vector<8x8xf32>
    %66 = tpu.matmul %65, %51, %cst_25 {dimension_numbers = #tpu.dot_dimension_numbers<[1], [0], [0], [1], [0, 0, 1, 1], [], []>} : vector<8x8xbf16>, vector<8x8xbf16>, vector<8x8xf32> -> vector<8x8xf32>
    %67 = vector.extract_strided_slice %20 {offsets = [0, 16], sizes = [8, 8], strides = [1, 1]} : vector<8x32xf32> to vector<8x8xf32>
    %68 = arith.truncf %67 : vector<8x8xf32> to vector<8x8xbf16>
    %69 = vector.extract_strided_slice %22 {offsets = [0, 16], sizes = [8, 8], strides = [1, 1]} : vector<8x64xf32> to vector<8x8xf32>
    %70 = arith.truncf %69 : vector<8x8xf32> to vector<8x8xbf16>
    %71 = vector.extract_strided_slice %22 {offsets = [0, 48], sizes = [8, 8], strides = [1, 1]} : vector<8x64xf32> to vector<8x8xf32>
    %72 = arith.truncf %71 : vector<8x8xf32> to vector<8x8xbf16>
    %cst_26 = arith.constant dense<0.000000e+00> : vector<8x8xf32>
    %73 = tpu.matmul %68, %70, %cst_26 {dimension_numbers = #tpu.dot_dimension_numbers<[1], [1], [0], [0], [0, 0, 1, 0], [], []>} : vector<8x8xbf16>, vector<8x8xbf16>, vector<8x8xf32> -> vector<8x8xf32>
    %74 = vector.broadcast %24 : vector<1x8xf32> to vector<8x8xf32>
    %75 = arith.addf %73, %74 : vector<8x8xf32>
    %cst_27 = arith.constant dense<0xFF800000> : vector<8xf32>
    %76 = vector.multi_reduction <maximumf>, %75, %cst_27 [1] : vector<8x8xf32> to vector<8xf32>
    %77 = vector.shape_cast %76 : vector<8xf32> to vector<8x1xf32>
    %78 = vector.broadcast %77 : vector<8x1xf32> to vector<8x8xf32>
    %79 = arith.subf %75, %78 : vector<8x8xf32>
    %80 = math.exp %79 : vector<8x8xf32>
    %cst_28 = arith.constant dense<0.000000e+00> : vector<8xf32>
    %81 = vector.multi_reduction <add>, %80, %cst_28 [1] : vector<8x8xf32> to vector<8xf32>
    %82 = vector.shape_cast %81 : vector<8xf32> to vector<8x1xf32>
    %83 = tpu.reciprocal %82 {approx = true} : vector<8x1xf32> -> vector<8x1xf32>
    %84 = vector.broadcast %83 : vector<8x1xf32> to vector<8x8xf32>
    %85 = arith.mulf %80, %84 : vector<8x8xf32>
    %86 = arith.truncf %85 : vector<8x8xf32> to vector<8x8xbf16>
    %cst_29 = arith.constant dense<0.000000e+00> : vector<8x8xf32>
    %87 = tpu.matmul %86, %72, %cst_29 {dimension_numbers = #tpu.dot_dimension_numbers<[1], [0], [0], [1], [0, 0, 1, 1], [], []>} : vector<8x8xbf16>, vector<8x8xbf16>, vector<8x8xf32> -> vector<8x8xf32>
    %88 = vector.extract_strided_slice %20 {offsets = [0, 24], sizes = [8, 8], strides = [1, 1]} : vector<8x32xf32> to vector<8x8xf32>
    %89 = arith.truncf %88 : vector<8x8xf32> to vector<8x8xbf16>
    %90 = vector.extract_strided_slice %22 {offsets = [0, 24], sizes = [8, 8], strides = [1, 1]} : vector<8x64xf32> to vector<8x8xf32>
    %91 = arith.truncf %90 : vector<8x8xf32> to vector<8x8xbf16>
    %92 = vector.extract_strided_slice %22 {offsets = [0, 56], sizes = [8, 8], strides = [1, 1]} : vector<8x64xf32> to vector<8x8xf32>
    %93 = arith.truncf %92 : vector<8x8xf32> to vector<8x8xbf16>
    %cst_30 = arith.constant dense<0.000000e+00> : vector<8x8xf32>
    %94 = tpu.matmul %89, %91, %cst_30 {dimension_numbers = #tpu.dot_dimension_numbers<[1], [1], [0], [0], [0, 0, 1, 0], [], []>} : vector<8x8xbf16>, vector<8x8xbf16>, vector<8x8xf32> -> vector<8x8xf32>
    %95 = vector.broadcast %24 : vector<1x8xf32> to vector<8x8xf32>
    %96 = arith.addf %94, %95 : vector<8x8xf32>
    %cst_31 = arith.constant dense<0xFF800000> : vector<8xf32>
    %97 = vector.multi_reduction <maximumf>, %96, %cst_31 [1] : vector<8x8xf32> to vector<8xf32>
    %98 = vector.shape_cast %97 : vector<8xf32> to vector<8x1xf32>
    %99 = vector.broadcast %98 : vector<8x1xf32> to vector<8x8xf32>
    %100 = arith.subf %96, %99 : vector<8x8xf32>
    %101 = math.exp %100 : vector<8x8xf32>
    %cst_32 = arith.constant dense<0.000000e+00> : vector<8xf32>
    %102 = vector.multi_reduction <add>, %101, %cst_32 [1] : vector<8x8xf32> to vector<8xf32>
    %103 = vector.shape_cast %102 : vector<8xf32> to vector<8x1xf32>
    %104 = tpu.reciprocal %103 {approx = true} : vector<8x1xf32> -> vector<8x1xf32>
    %105 = vector.broadcast %104 : vector<8x1xf32> to vector<8x8xf32>
    %106 = arith.mulf %101, %105 : vector<8x8xf32>
    %107 = arith.truncf %106 : vector<8x8xf32> to vector<8x8xbf16>
    %cst_33 = arith.constant dense<0.000000e+00> : vector<8x8xf32>
    %108 = tpu.matmul %107, %93, %cst_33 {dimension_numbers = #tpu.dot_dimension_numbers<[1], [0], [0], [1], [0, 0, 1, 1], [], []>} : vector<8x8xbf16>, vector<8x8xbf16>, vector<8x8xf32> -> vector<8x8xf32>
    %109 = tpu.concatenate %45, %66, %87, %108 in 1 : vector<8x8xf32>, vector<8x8xf32>, vector<8x8xf32>, vector<8x8xf32> -> vector<8x32xf32>
    %110 = arith.truncf %109 : vector<8x32xf32> to vector<8x32xbf16>
    %c0_34 = arith.constant 0 : index
    %c0_35 = arith.constant 0 : index
    %111 = vector.load %arg6[%c0_34, %c0_35] : memref<32x32xbf16, #tpu.memory_space<vmem>>, vector<32x32xbf16>
    %cst_36 = arith.constant dense<0.000000e+00> : vector<8x32xf32>
    %112 = tpu.matmul %110, %111, %cst_36 {dimension_numbers = #tpu.dot_dimension_numbers<[1], [0], [0], [1], [0, 0, 1, 1], [], []>} : vector<8x32xbf16>, vector<32x32xbf16>, vector<8x32xf32> -> vector<8x32xf32>
    %113 = arith.addf %1, %112 : vector<8x32xf32>
    %c0_37 = arith.constant 0 : index
    %c0_38 = arith.constant 0 : index
    %c0_39 = arith.constant 0 : index
    %114 = vector.load %arg8[%c0_37, %c0_38, %c0_39] : memref<1x8x32xf32, #tpu.memory_space<vmem>>, vector<1x8x32xf32>
    %115 = vector.shape_cast %114 : vector<1x8x32xf32> to vector<8x32xf32>
    %116 = vector.shape_cast %113 : vector<8x32xf32> to vector<1x8x32xf32>
    tpu.vector_store %arg8[%c0_37, %c0_38, %c0_39], %116 {strides = array<i32>} : memref<1x8x32xf32, #tpu.memory_space<vmem>>, vector<1x8x32xf32>,
    return
  }
  func.func @transform_0(%arg0: i32) -> (i32, i32, i32) {
    %c0_i32 = arith.constant 0 : i32
    %c0_i32_0 = arith.constant 0 : i32
    %c0_i32_1 = arith.constant 0 : i32
    return %arg0, %c0_i32, %c0_i32_0 : i32, i32, i32
  }
  func.func @transform_1(%arg0: i32) -> (i32, i32, i32) {
    %c0_i32 = arith.constant 0 : i32
    %c0_i32_0 = arith.constant 0 : i32
    %c0_i32_1 = arith.constant 0 : i32
    return %arg0, %c0_i32, %c0_i32_0 : i32, i32, i32
  }
  func.func @transform_2(%arg0: i32) -> (i32, i32) {
    %c0_i32 = arith.constant 0 : i32
    %c0_i32_0 = arith.constant 0 : i32
    %c0_i32_1 = arith.constant 0 : i32
    return %c0_i32, %c0_i32_0 : i32, i32
  }
  func.func @transform_3(%arg0: i32) -> (i32, i32) {
    %c0_i32 = arith.constant 0 : i32
    %c0_i32_0 = arith.constant 0 : i32
    %c0_i32_1 = arith.constant 0 : i32
    return %c0_i32, %c0_i32_0 : i32, i32
  }
  func.func @transform_4(%arg0: i32) -> (i32, i32) {
    %c0_i32 = arith.constant 0 : i32
    %c0_i32_0 = arith.constant 0 : i32
    %c0_i32_1 = arith.constant 0 : i32
    return %c0_i32, %c0_i32_0 : i32, i32
  }
  func.func @transform_5(%arg0: i32) -> (i32, i32) {
    %c0_i32 = arith.constant 0 : i32
    %c0_i32_0 = arith.constant 0 : i32
    %c0_i32_1 = arith.constant 0 : i32
    return %c0_i32, %c0_i32_0 : i32, i32
  }
  func.func @transform_6(%arg0: i32) -> (i32, i32, i32) {
    %c0_i32 = arith.constant 0 : i32
    %c0_i32_0 = arith.constant 0 : i32
    %c0_i32_1 = arith.constant 0 : i32
    return %arg0, %c0_i32, %c0_i32_0 : i32, i32, i32
  }
  func.func @transform_7(%arg0: i32) -> (i32, i32, i32) {
    %c0_i32 = arith.constant 0 : i32
    %c0_i32_0 = arith.constant 0 : i32
    %c0_i32_1 = arith.constant 0 : i32
    return %arg0, %c0_i32, %c0_i32_0 : i32, i32, i32
  }
}

module attributes {stable_mosaic.version = 11 : i64} {
  func.func @_final_head_kernel(%arg0: i32, %arg1: memref<8x32xf32, #tpu.memory_space<vmem>>, %arg2: memref<1x32xf32, #tpu.memory_space<vmem>>, %arg3: memref<32x256xbf16, #tpu.memory_space<vmem>>, %arg4: memref<8x256xf32, #tpu.memory_space<vmem>>) attributes {dimension_semantics = [#tpu.dimension_semantics<parallel>], iteration_bounds = array<i64: 2>, scalar_prefetch = 0 : i64, scratch_operands = 0 : i64, tpu.core_type = #tpu.core_type<tc>, window_params = [{transform_indices = @transform_0, window_bounds = array<i64: 8, 32>}, {pipeline_mode = #tpu.pipeline_mode<synchronous>, transform_indices = @transform_1, window_bounds = array<i64: 1, 32>}, {pipeline_mode = #tpu.pipeline_mode<synchronous>, transform_indices = @transform_2, window_bounds = array<i64: 32, 256>}, {transform_indices = @transform_3, window_bounds = array<i64: 8, 256>}]} {
    %c0 = arith.constant 0 : index
    %c0_0 = arith.constant 0 : index
    %0 = vector.load %arg1[%c0, %c0_0] : memref<8x32xf32, #tpu.memory_space<vmem>>, vector<8x32xf32>
    %1 = arith.mulf %0, %0 : vector<8x32xf32>
    %cst = arith.constant dense<0.000000e+00> : vector<8xf32>
    %2 = vector.multi_reduction <add>, %1, %cst [1] : vector<8x32xf32> to vector<8xf32>
    %3 = vector.shape_cast %2 : vector<8xf32> to vector<8x1xf32>
    %cst_1 = arith.constant 3.200000e+01 : f32
    %4 = vector.broadcast %cst_1 : f32 to vector<8x1xf32>
    %5 = arith.divf %3, %4 : vector<8x1xf32>
    %cst_2 = arith.constant 9.99999997E-7 : f32
    %6 = vector.broadcast %cst_2 : f32 to vector<8x1xf32>
    %7 = arith.addf %5, %6 : vector<8x1xf32>
    %8 = math.rsqrt %7 : vector<8x1xf32>
    %9 = vector.broadcast %8 : vector<8x1xf32> to vector<8x32xf32>
    %10 = arith.mulf %0, %9 : vector<8x32xf32>
    %c0_3 = arith.constant 0 : index
    %c0_4 = arith.constant 0 : index
    %11 = vector.load %arg2[%c0_3, %c0_4] : memref<1x32xf32, #tpu.memory_space<vmem>>, vector<1x32xf32>
    %12 = vector.broadcast %11 : vector<1x32xf32> to vector<8x32xf32>
    %13 = arith.mulf %10, %12 : vector<8x32xf32>
    %14 = arith.truncf %13 : vector<8x32xf32> to vector<8x32xbf16>
    %c0_5 = arith.constant 0 : index
    %c0_6 = arith.constant 0 : index
    %15 = vector.load %arg3[%c0_5, %c0_6] : memref<32x256xbf16, #tpu.memory_space<vmem>>, vector<32x256xbf16>
    %cst_7 = arith.constant dense<0.000000e+00> : vector<8x256xf32>
    %16 = tpu.matmul %14, %15, %cst_7 {dimension_numbers = #tpu.dot_dimension_numbers<[1], [0], [0], [1], [0, 0, 1, 1], [], []>} : vector<8x32xbf16>, vector<32x256xbf16>, vector<8x256xf32> -> vector<8x256xf32>
    %c0_8 = arith.constant 0 : index
    %c0_9 = arith.constant 0 : index
    %17 = vector.load %arg4[%c0_8, %c0_9] : memref<8x256xf32, #tpu.memory_space<vmem>>, vector<8x256xf32>
    tpu.vector_store %arg4[%c0_8, %c0_9], %16 {strides = array<i32>} : memref<8x256xf32, #tpu.memory_space<vmem>>, vector<8x256xf32>,
    return
  }
  func.func @transform_0(%arg0: i32) -> (i32, i32) {
    %c0_i32 = arith.constant 0 : i32
    %c0_i32_0 = arith.constant 0 : i32
    return %arg0, %c0_i32 : i32, i32
  }
  func.func @transform_1(%arg0: i32) -> (i32, i32) {
    %c0_i32 = arith.constant 0 : i32
    %c0_i32_0 = arith.constant 0 : i32
    %c0_i32_1 = arith.constant 0 : i32
    return %c0_i32, %c0_i32_0 : i32, i32
  }
  func.func @transform_2(%arg0: i32) -> (i32, i32) {
    %c0_i32 = arith.constant 0 : i32
    %c0_i32_0 = arith.constant 0 : i32
    %c0_i32_1 = arith.constant 0 : i32
    return %c0_i32, %c0_i32_0 : i32, i32
  }
  func.func @transform_3(%arg0: i32) -> (i32, i32) {
    %c0_i32 = arith.constant 0 : i32
    %c0_i32_0 = arith.constant 0 : i32
    return %arg0, %c0_i32 : i32, i32
  }
}

</mosaic_0001>

<llo_original>
// kernel: t5_lm_forward.16
$region0: #{t5_lm_forward.16}
  #allocation0 [shape = 'u32[]', space=smem, size = 0x4, offset = 0x4, fixed_abs, tag = 'smem constant byte address 0x4 - core index']
  #allocation1 [shape = 'u32[72,128]{1,0:T(1,128)}', space=vmem, size = 0x9000, scoped, tag = 'internal scratch']
  %s0 = inlined_call_operand.vmem [shape: f32[16,32], index: 0, kind: input, shape index: {}]
  %s1 = inlined_call_operand.vmem [shape: f32[1,32], index: 1, kind: input, shape index: {}]
  %s2 = inlined_call_operand.vmem [shape: f32[16,32], index: 2, kind: output, shape index: {}]
  %s3 = sld [smem:[#allocation0]]
  $region18: #{t5_lm_forward.16} parent=0
    _
  %s5 = ssub.s32 1, %s3
  %s6 = scalar_select 0, %s5, %s3
  // Predicated region
  $region2: #{t5_lm_forward.16} parent=0 // pred_check
    _
  $region3: #{t5_lm_forward.16} parent=0 // pred_check_branch
    %8 = sbr.rel (0) target = $region5
  $region4: #{t5_lm_forward.16} parent=0 // pred_region
    _
  $region5: #{t5_lm_forward.16} parent=0 // pred_fallthru
    _
  // Predicated region
  $region6: #{t5_lm_forward.16} parent=0 // pred_check
    _
  $region7: #{t5_lm_forward.16} parent=0 // pred_check_branch
    %10 = sbr.rel (0) target = $region9
  $region8: #{t5_lm_forward.16} parent=0 // pred_region
    _
  $region9: #{t5_lm_forward.16} parent=0 // pred_fallthru
    _
  %v11 = vld [vmem:[%s0] sm:$0xff]
  %v12 = vld [vmem:[%s0 + $0x8] sm:$0xff]
  %v13 = vmul.f32 %v11, %v11
  %v14 = vmul.f32 %v12, %v12
  %vm15 = vcmask 261120
  %v16 = vsel %vm15, %v13, 0.0
  %17 = vadd.xlane.f32.xlu0 %v16
  %v18 = vpop.xlane.xlu0 %17
  %v19 = vsel %vm15, %v14, 0.0
  %20 = vadd.xlane.f32.xlu0 %v19
  %v21 = vpop.xlane.xlu0 %20
  %v22 = vrcp.pop 32.0
  %v23 = vmul.f32 32.0, %v22
  %v24 = vsub.f32 1.0, %v23
  %v25 = vmul.f32 %v22, %v24
  %v26 = vadd.f32 %v22, %v25
  %vm27 = vweird.f32 %v22
  %v28 = vsel %vm27, %v22, %v26
  %v29 = vmul.f32 %v18, %v28
  %v30 = vmul.f32 %v21, %v28
  %v31 = vadd.f32 %v29, 1e-06
  %v32 = vadd.f32 %v30, 1e-06
  %v33 = vrsqrt.pop %v31
  %v34 = vmul.f32 %v33, %v31
  %v35 = vmul.f32 %v34, %v33
  %v36 = vmul.f32 0.5, %v35
  %v37 = vsub.f32 1.5, %v36
  %v38 = vmul.f32 %v33, %v37
  %vm39 = vweird.f32 %v31
  %vm40 = vweird.f32 %v33
  %vm41 = vmor %vm39, %vm40
  %v42 = vsel %vm41, %v33, %v38
  %v43 = vrsqrt.pop %v32
  %v44 = vmul.f32 %v43, %v32
  %v45 = vmul.f32 %v44, %v43
  %v46 = vmul.f32 0.5, %v45
  %v47 = vsub.f32 1.5, %v46
  %v48 = vmul.f32 %v43, %v47
  %vm49 = vweird.f32 %v32
  %vm50 = vweird.f32 %v43
  %vm51 = vmor %vm49, %vm50
  %v52 = vsel %vm51, %v43, %v48
  %v53 = vmul.f32 %v11, %v42
  %v54 = vmul.f32 %v12, %v52
  %v55 = vld [vmem:[%s1] sm:$0x1]
  %v57 = vperm.slane %v55, 0
  %v59 = vmul.f32 %v53, %v57
  %v60 = vmul.f32 %v54, %v57
  %61 = vst.msk [vmem:[%s2] sm:$0xff] %vm15, %v59
  %62 = vst.msk [vmem:[%s2 + $0x8] sm:$0xff] %vm15, %v60
  // Predicated region
  $region10: #{t5_lm_forward.16} parent=0 // pred_check
    _
  $region11: #{t5_lm_forward.16} parent=0 // pred_check_branch
    %64 = sbr.rel (0) target = $region13
  $region12: #{t5_lm_forward.16} parent=0 // pred_region
    _
  $region13: #{t5_lm_forward.16} parent=0 // pred_fallthru
    _
  // Predicated region
  $region14: #{t5_lm_forward.16} parent=0 // pred_check
    _
  $region15: #{t5_lm_forward.16} parent=0 // pred_check_branch
    %66 = sbr.rel (0) target = $region17
  $region16: #{t5_lm_forward.16} parent=0 // pred_region
    _
  $region17: #{t5_lm_forward.16} parent=0 // pred_fallthru
    _

// kernel: t5_lm_forward.13
$region0: #{t5_lm_forward.13}
  #allocation0 [shape = 'u32[]', space=smem, size = 0x4, offset = 0x4, fixed_abs, tag = 'smem constant byte address 0x4 - core index']
  #allocation1 [shape = 'u32[72,128]{1,0:T(1,128)}', space=vmem, size = 0x9000, scoped, tag = 'internal scratch']
  %s0 = inlined_call_operand.vmem [shape: f32[16,32], index: 0, kind: input, shape index: {}]
  %s1 = inlined_call_operand.vmem [shape: f32[1,32], index: 1, kind: input, shape index: {}]
  %s2 = inlined_call_operand.vmem [shape: bf16[32,128], index: 2, kind: input, shape index: {}]
  %s3 = inlined_call_operand.vmem [shape: bf16[64,32], index: 3, kind: input, shape index: {}]
  %s4 = inlined_call_operand.vmem [shape: f32[16,32], index: 4, kind: output, shape index: {}]
  %s5 = sld [smem:[#allocation0]]
  $region49: #{t5_lm_forward.13} parent=0
    _
  %s7 = ssub.s32 1, %s5
  %s8 = scalar_select 0, %s7, %s5
  loop: start=0, step=1, limit=4
  $region2: #{t5_lm_forward.13} parent=0 // loop_pre_header
    _
  $region3: #{t5_lm_forward.13} parent=0 // loop_header
    %s10 = sphi 0, %s14
    %p11 = scmp.ge.s32.totalorder %s10, 4
    %s20 = sphi 0, %s22
    %s23 = sphi 0, %s20
    %s24 = sphi 0, %s23
    %s40 = sphi 0, %s24
    %s44 = sphi 0, %s44
    %s46 = sphi 0, %s44
    %s47 = sphi 0, %s46
    %s61 = sphi 0, %s47
    %s65 = sphi 0, %s65
    %s67 = sphi 0, %s65
    %s68 = sphi 0, %s67
    %s82 = sphi 0, %s68
    %s86 = sphi 0, %s86
    %s88 = sphi 0, %s86
    %s89 = sphi 0, %s88
    %s103 = sphi 0, %s89
    %s109 = sphi 0, %s111
    %s112 = sphi 0, %s109
    %s113 = sphi 0, %s112
    %s129 = sphi 0, %s113
  $region4: #{t5_lm_forward.13} parent=0 // loop_header_branch
    %13 = sbr.rel (%p11) target = $region8
  $region5: #{t5_lm_forward.13} parent=0 // loop_body
    %s15 = ssub.s32 %s10, 1
    %s16 = ssub.s32 %s10, 2
    %s17 = sadd.s32 %s10, 1
    %s18 = ssub.s32 %s10, %s17
    %p19 = scmp.eq.s32.totalorder %s18, 0
    %s21 = sadd.s32 %s20, 1
    %s22 = scalar_select %p19, %s20, %s21
    %p25 = pneg %p19
    %p26 = scmp.eq.s32.totalorder %s10, 1
    %p27 = por %p25, %p26
    %p28 = scmp.ne.s32.totalorder %s20, %s23
    %p29 = scmp.eq.s32.totalorder %s10, 0
    %p30 = por %p28, %p29
    %p31 = scmp.ne.s32.totalorder %s20, %s23
    %p32 = scmp.eq.s32.totalorder %s15, 1
    %p33 = por %p31, %p32
    %p34 = scmp.ne.s32.totalorder %s23, %s24
    %p35 = scmp.eq.s32.totalorder %s15, 0
    %p36 = por %p34, %p35
    %p37 = scmp.ne.s32.totalorder %s23, %s24
    %p38 = scmp.eq.s32.totalorder %s16, 1
    %p39 = por %p37, %p38
    %p41 = scmp.ne.s32.totalorder %s24, %s40
    %p42 = scmp.eq.s32.totalorder %s16, 0
    %p43 = por %p41, %p42
    %s45 = sadd.s32 %s44, 1
    %p48 = scmp.eq.s32.totalorder %s10, 1
    %p49 = scmp.ne.s32.totalorder %s44, %s46
    %p50 = scmp.eq.s32.totalorder %s10, 0
    %p51 = por %p49, %p50
    %p52 = scmp.ne.s32.totalorder %s44, %s46
    %p53 = scmp.eq.s32.totalorder %s15, 1
    %p54 = por %p52, %p53
    %p55 = scmp.ne.s32.totalorder %s46, %s47
    %p56 = scmp.eq.s32.totalorder %s15, 0
    %p57 = por %p55, %p56
    %p58 = scmp.ne.s32.totalorder %s46, %s47
    %p59 = scmp.eq.s32.totalorder %s16, 1
    %p60 = por %p58, %p59
    %p62 = scmp.ne.s32.totalorder %s47, %s61
    %p63 = scmp.eq.s32.totalorder %s16, 0
    %p64 = por %p62, %p63
    %s66 = sadd.s32 %s65, 1
    %p69 = scmp.eq.s32.totalorder %s10, 1
    %p70 = scmp.ne.s32.totalorder %s65, %s67
    %p71 = scmp.eq.s32.totalorder %s10, 0
    %p72 = por %p70, %p71
    %p73 = scmp.ne.s32.totalorder %s65, %s67
    %p74 = scmp.eq.s32.totalorder %s15, 1
    %p75 = por %p73, %p74
    %p76 = scmp.ne.s32.totalorder %s67, %s68
    %p77 = scmp.eq.s32.totalorder %s15, 0
    %p78 = por %p76, %p77
    %p79 = scmp.ne.s32.totalorder %s67, %s68
    %p80 = scmp.eq.s32.totalorder %s16, 1
    %p81 = por %p79, %p80
    %p83 = scmp.ne.s32.totalorder %s68, %s82
    %p84 = scmp.eq.s32.totalorder %s16, 0
    %p85 = por %p83, %p84
    %s87 = sadd.s32 %s86, 1
    %p90 = scmp.eq.s32.totalorder %s10, 1
    %p91 = scmp.ne.s32.totalorder %s86, %s88
    %p92 = scmp.eq.s32.totalorder %s10, 0
    %p93 = por %p91, %p92
    %p94 = scmp.ne.s32.totalorder %s86, %s88
    %p95 = scmp.eq.s32.totalorder %s15, 1
    %p96 = por %p94, %p95
    %p97 = scmp.ne.s32.totalorder %s88, %s89
    %p98 = scmp.eq.s32.totalorder %s15, 0
    %p99 = por %p97, %p98
    %p100 = scmp.ne.s32.totalorder %s88, %s89
    %p101 = scmp.eq.s32.totalorder %s16, 1
    %p102 = por %p100, %p101
    %p104 = scmp.ne.s32.totalorder %s89, %s103
    %p105 = scmp.eq.s32.totalorder %s16, 0
    %p106 = por %p104, %p105
    %s107 = ssub.s32 %s10, %s17
    %p108 = scmp.eq.s32.totalorder %s107, 0
    %s110 = sadd.s32 %s109, 1
    %s111 = scalar_select %p108, %s109, %s110
    %p114 = pneg %p108
    %p115 = scmp.eq.s32.totalorder %s10, 1
    %p116 = por %p114, %p115
    %p117 = scmp.ne.s32.totalorder %s109, %s112
    %p118 = scmp.eq.s32.totalorder %s10, 0
    %p119 = por %p117, %p118
    %p120 = scmp.ne.s32.totalorder %s109, %s112
    %p121 = scmp.eq.s32.totalorder %s15, 1
    %p122 = por %p120, %p121
    %p123 = scmp.ne.s32.totalorder %s112, %s113
    %p124 = scmp.eq.s32.totalorder %s15, 0
    %p125 = por %p123, %p124
    %p126 = scmp.ne.s32.totalorder %s112, %s113
    %p127 = scmp.eq.s32.totalorder %s16, 1
    %p128 = por %p126, %p127
    %p130 = scmp.ne.s32.totalorder %s113, %s129
    %p131 = scmp.eq.s32.totalorder %s16, 0
    %p132 = por %p130, %p131
    %p133 = scmp.le.s32.totalorder 1, %s10
    %p134 = scmp.lt.s32.totalorder %s10, 3
    %p135 = pnand %p133, %p134
    %p136 = pneg %p135
    // Predicated region
    $region9: #{t5_lm_forward.13} parent=5 // pred_check
      _
    $region10: #{t5_lm_forward.13} parent=5 // pred_check_branch
      %138 = sbr.rel (%p135) target = $region12
    $region11: #{t5_lm_forward.13} parent=5 // pred_region
      %s139 = ssub.s32 %s10, 1
      // Predicated region
      $region13: #{t5_lm_forward.13} parent=11 // pred_check
        %p140 = pneg %p57
      $region14: #{t5_lm_forward.13} parent=11 // pred_check_branch
        %142 = sbr.rel (%p140) target = $region16
      $region15: #{t5_lm_forward.13} parent=11 // pred_region
        _
      $region16: #{t5_lm_forward.13} parent=11 // pred_fallthru
        _
      // Predicated region
      $region17: #{t5_lm_forward.13} parent=11 // pred_check
        %p143 = pneg %p78
      $region18: #{t5_lm_forward.13} parent=11 // pred_check_branch
        %145 = sbr.rel (%p143) target = $region20
      $region19: #{t5_lm_forward.13} parent=11 // pred_region
        _
      $region20: #{t5_lm_forward.13} parent=11 // pred_fallthru
        _
      // Predicated region
      $region21: #{t5_lm_forward.13} parent=11 // pred_check
        %p146 = pneg %p99
      $region22: #{t5_lm_forward.13} parent=11 // pred_check_branch
        %148 = sbr.rel (%p146) target = $region24
      $region23: #{t5_lm_forward.13} parent=11 // pred_region
        _
      $region24: #{t5_lm_forward.13} parent=11 // pred_fallthru
        _
    $region12: #{t5_lm_forward.13} parent=5 // pred_fallthru
      _
    %p149 = scmp.lt.s32.totalorder %s10, 2
    // Predicated region
    $region25: #{t5_lm_forward.13} parent=5 // pred_check
      %p150 = pneg %p149
    $region26: #{t5_lm_forward.13} parent=5 // pred_check_branch
      %152 = sbr.rel (%p150) target = $region28
    $region27: #{t5_lm_forward.13} parent=5 // pred_region
      // Predicated region
      $region29: #{t5_lm_forward.13} parent=27 // pred_check
        %p153 = pneg %p30
      $region30: #{t5_lm_forward.13} parent=27 // pred_check_branch
        %155 = sbr.rel (%p153) target = $region32
      $region31: #{t5_lm_forward.13} parent=27 // pred_region
        %p156 = scmp.lt.s32.totalorder %s10, 1
        %s157 = scalar_select %p156, %s10, 1
        %s158 = smul.addr %s157, 8
        %s159 = scalar_lea.vmem %s0, %s158
      $region32: #{t5_lm_forward.13} parent=27 // pred_fallthru
        _
    $region28: #{t5_lm_forward.13} parent=5 // pred_fallthru
      _
    %p160 = scmp.le.s32.totalorder 1, %s10
    %p161 = scmp.lt.s32.totalorder %s10, 3
    %p162 = pnand %p160, %p161
    %p163 = pneg %p162
    // Predicated region
    $region33: #{t5_lm_forward.13} parent=5 // pred_check
      _
    $region34: #{t5_lm_forward.13} parent=5 // pred_check_branch
      %165 = sbr.rel (%p162) target = $region36
    $region35: #{t5_lm_forward.13} parent=5 // pred_region
      %s166 = ssub.s32 %s10, 1
      %p167 = scmp.lt.s32.totalorder %s15, 1
      %s168 = scalar_select %p167, %s15, 1
      %s169 = smul.addr %s168, 8
      %s170 = scalar_lea.vmem %s0, %s169
      %p171 = pneg %p36
      %p172 = pneg %p33
      %p173 = pneg %p57
      %p174 = pneg %p54
      %p175 = pneg %p78
      %p176 = pneg %p75
      %p177 = pneg %p99
      %p178 = pneg %p96
      %p179 = pneg %p125
      %p180 = pneg %p122
      %p181 = scmp.lt.s32.totalorder %s15, 1
      %s182 = scalar_select %p181, %s15, 1
      %s183 = smul.addr %s182, 8
      %s184 = scalar_lea.vmem %s4, %s183
      %p185 = scmp.lt.s32.totalorder %s15, 1
      %s186 = scalar_select %p185, %s15, 1
      %s187 = smul.addr %s186, 8
      %s188 = scalar_lea.vmem %s0, %s187
      %p189 = scmp.lt.s32.totalorder %s15, 1
      %s190 = scalar_select %p189, %s15, 1
      %s191 = smul.addr %s190, 8
      %s192 = scalar_lea.vmem %s4, %s191
      %v194 = vld [vmem:[%s188] sm:$0xff]
      %v195 = vmul.f32 %v194, %v194
      %vm196 = vcmask 261120
      %v197 = vsel %vm196, %v195, 0.0
      %198 = vadd.xlane.f32.xlu0 %v197
      %v199 = vpop.xlane.xlu0 %198
      %v200 = vrcp.pop 32.0
      %v201 = vmul.f32 32.0, %v200
      %v202 = vsub.f32 1.0, %v201
      %v203 = vmul.f32 %v200, %v202
      %v204 = vadd.f32 %v200, %v203
      %vm205 = vweird.f32 %v200
      %v206 = vsel %vm205, %v200, %v204
      %v207 = vmul.f32 %v199, %v206
      %v208 = vadd.f32 %v207, 1e-06
      %v209 = vrsqrt.pop %v208
      %v210 = vmul.f32 %v209, %v208
      %v211 = vmul.f32 %v210, %v209
      %v212 = vmul.f32 0.5, %v211
      %v213 = vsub.f32 1.5, %v212
      %v214 = vmul.f32 %v209, %v213
      %vm215 = vweird.f32 %v208
      %vm216 = vweird.f32 %v209
      %vm217 = vmor %vm215, %vm216
      %v218 = vsel %vm217, %v209, %v214
      %v219 = vmul.f32 %v194, %v218
      %v220 = vld [vmem:[%s1] sm:$0x1]
      %v222 = vperm.slane %v220, 0
      %v224 = vmul.f32 %v219, %v222
      %v225 = vpack.c.bf16 %v224, %v224
      %v226 = vld [vmem:[%s2] sm:$0xf]
      %v227 = vld [vmem:[%s2 + $0x4] sm:$0xf]
      %v228 = vld [vmem:[%s2 + $0x8] sm:$0xf]
      %v229 = vld [vmem:[%s2 + $0xc] sm:$0xf]
      %v234 = vunpack.c.l.b16 %v226
      %v235 = vunpack.c.l.b16 %v227
      %v236 = vunpack.c.l.b16 %v228
      %v237 = vunpack.c.l.b16 %v229
      %v238 = vpack.c.b16 %v235, %v234
      %v239 = vpack.c.b16 %v237, %v236
      %v243 = vsel %vm196, %v225, 0
      %245 = vmatpush.bf16.msra.mxu0 0
      %246 = vmatpush.bf16.msra.mxu0 0
      %247 = vmatpush.bf16.msra.mxu0 0
      %248 = vmatpush.bf16.msra.mxu0 0
      %249 = vmatpush.bf16.msra.mxu0 0
      %250 = vmatpush.bf16.msra.mxu0 0
      %251 = vmatpush.bf16.msra.mxu0 %v239
      %252 = vmatpush.bf16.msra.mxu0 %v238
      %253 = vmatmul.bf16.gmra.mxu0 %v243
      %v254 = vpop.f32.mrf.mxu0
      %v255 = vadd.f32 0.0, %v254
      %v256 = vpop.f32.mrf.mxu0
      %257 = vdwg.mxu0
      %v258 = vmul.f32 %v255, 0.5
      %v259 = vmul.f32 %v255, 0.044715
      %v260 = vmul.f32 %v259, %v255
      %v261 = vmul.f32 %v260, %v255
      %v262 = vadd.f32 %v255, %v261
      %v263 = vmul.f32 %v262, 0.7978846
      %v264 = vtanh.pop %v263
      %v265 = vadd.f32 %v264, 1.0
      %v266 = vmul.f32 %v258, %v265
      %268 = vrot.lane.b32.xlu0 %v255, 64
      %v269 = vpop.permute.xlu0 %268
      %v271 = vmul.f32 %v266, %v269
      %v272 = vpack.c.bf16 %v271, %v271
      %v273 = vld [vmem:[%s3] sm:$0xf]
      %v274 = vld [vmem:[%s3 + $0x4] sm:$0xf]
      %v275 = vld [vmem:[%s3 + $0x8] sm:$0xf]
      %v276 = vld [vmem:[%s3 + $0xc] sm:$0xf]
      %v277 = vld [vmem:[%s3 + $0x10] sm:$0xf]
      %v278 = vld [vmem:[%s3 + $0x14] sm:$0xf]
      %v279 = vld [vmem:[%s3 + $0x18] sm:$0xf]
      %v280 = vld [vmem:[%s3 + $0x1c] sm:$0xf]
      %v289 = vunpack.c.l.b16 %v273
      %v290 = vunpack.c.l.b16 %v274
      %v291 = vunpack.c.l.b16 %v275
      %v292 = vunpack.c.l.b16 %v276
      %v293 = vunpack.c.l.b16 %v277
      %v294 = vunpack.c.l.b16 %v278
      %v295 = vunpack.c.l.b16 %v279
      %v296 = vunpack.c.l.b16 %v280
      %v297 = vpack.c.b16 %v290, %v289
      %v298 = vpack.c.b16 %v292, %v291
      %v299 = vpack.c.b16 %v294, %v293
      %v300 = vpack.c.b16 %v296, %v295
      %vm305 = vcmask 523264
      %v307 = vsel %vm305, %v272, 0
      %309 = vmatpush.bf16.msra.mxu0 0
      %310 = vmatpush.bf16.msra.mxu0 0
      %311 = vmatpush.bf16.msra.mxu0 0
      %312 = vmatpush.bf16.msra.mxu0 0
      %313 = vmatpush.bf16.msra.mxu0 %v300
      %314 = vmatpush.bf16.msra.mxu0 %v299
      %315 = vmatpush.bf16.msra.mxu0 %v298
      %316 = vmatpush.bf16.msra.mxu0 %v297
      %317 = vmatmul.bf16.gmra.mxu0 %v307
      %v318 = vpop.f32.mrf.mxu0
      %v319 = vadd.f32 0.0, %v318
      %v320 = vpop.f32.mrf.mxu0
      %321 = vdwg.mxu0
      %v322 = vadd.f32 %v194, %v319
      %323 = vst.msk [vmem:[%s192] sm:$0xff] %vm196, %v322
      %p324 = scmp.lt.s32.totalorder %s15, 1
      %s325 = scalar_select %p324, %s15, 1
      %s326 = smul.addr %s325, 8
      %s327 = scalar_lea.vmem %s4, %s326
      // Predicated region
      $region37: #{t5_lm_forward.13} parent=35 // pred_check
        %p328 = pneg %p122
      $region38: #{t5_lm_forward.13} parent=35 // pred_check_branch
        %330 = sbr.rel (%p328) target = $region40
      $region39: #{t5_lm_forward.13} parent=35 // pred_region
        _
      $region40: #{t5_lm_forward.13} parent=35 // pred_fallthru
        _
    $region36: #{t5_lm_forward.13} parent=5 // pred_fallthru
      _
    %p331 = scmp.le.s32.totalorder 2, %s10
    // Predicated region
    $region41: #{t5_lm_forward.13} parent=5 // pred_check
      %p332 = pneg %p331
    $region42: #{t5_lm_forward.13} parent=5 // pred_check_branch
      %334 = sbr.rel (%p332) target = $region44
    $region43: #{t5_lm_forward.13} parent=5 // pred_region
      %s335 = ssub.s32 %s10, 2
      // Predicated region
      $region45: #{t5_lm_forward.13} parent=43 // pred_check
        %p336 = pneg %p128
      $region46: #{t5_lm_forward.13} parent=43 // pred_check_branch
        %338 = sbr.rel (%p336) target = $region48
      $region47: #{t5_lm_forward.13} parent=43 // pred_region
        %p339 = scmp.lt.s32.totalorder %s16, 1
        %s340 = scalar_select %p339, %s16, 1
        %s341 = smul.addr %s340, 8
        %s342 = scalar_lea.vmem %s4, %s341
      $region48: #{t5_lm_forward.13} parent=43 // pred_fallthru
        _
    $region44: #{t5_lm_forward.13} parent=5 // pred_fallthru
      _
  $region6: #{t5_lm_forward.13} parent=0 // loop_footer
    %s14 = sadd.s32 1, %s10
  $region7: #{t5_lm_forward.13} parent=0 // loop_footer_branch
    %9 = sbr.rel target = $region3
  $region8: #{t5_lm_forward.13} parent=0 // loop_exit
    _

// kernel: t5_lm_forward.17
$region0: #{t5_lm_forward.17}
  #allocation0 [shape = 'u32[]', space=smem, size = 0x4, offset = 0x4, fixed_abs, tag = 'smem constant byte address 0x4 - core index']
  #allocation1 [shape = 'u32[72,128]{1,0:T(1,128)}', space=vmem, size = 0x9000, scoped, tag = 'internal scratch']
  %s0 = inlined_call_operand.vmem [shape: f32[2,8,32], index: 0, kind: input, shape index: {}]
  %s1 = inlined_call_operand.vmem [shape: f32[1,32], index: 1, kind: input, shape index: {}]
  %s2 = inlined_call_operand.vmem [shape: bf16[32,96], index: 2, kind: input, shape index: {}]
  %s3 = inlined_call_operand.vmem [shape: bf16[32,32], index: 3, kind: input, shape index: {}]
  %s4 = inlined_call_operand.vmem [shape: f32[4,8,8], index: 4, kind: input, shape index: {}]
  %s5 = inlined_call_operand.vmem [shape: f32[2,1,8], index: 5, kind: input, shape index: {}]
  %s6 = inlined_call_operand.vmem [shape: f32[2,8,32], index: 6, kind: output, shape index: {}]
  %s7 = sld [smem:[#allocation0]]
  $region57: #{t5_lm_forward.17} parent=0
    _
  %s9 = ssub.s32 1, %s7
  %s10 = scalar_select 0, %s9, %s7
  loop: start=0, step=1, limit=4
  $region2: #{t5_lm_forward.17} parent=0 // loop_pre_header
    _
  $region3: #{t5_lm_forward.17} parent=0 // loop_header
    %s12 = sphi 0, %s16
    %p13 = scmp.ge.s32.totalorder %s12, 4
    %s22 = sphi 0, %s24
    %s25 = sphi 0, %s22
    %s26 = sphi 0, %s25
    %s42 = sphi 0, %s26
    %s46 = sphi 0, %s46
    %s48 = sphi 0, %s46
    %s49 = sphi 0, %s48
    %s63 = sphi 0, %s49
    %s67 = sphi 0, %s67
    %s69 = sphi 0, %s67
    %s70 = sphi 0, %s69
    %s84 = sphi 0, %s70
    %s88 = sphi 0, %s88
    %s90 = sphi 0, %s88
    %s91 = sphi 0, %s90
    %s105 = sphi 0, %s91
    %s109 = sphi 0, %s109
    %s111 = sphi 0, %s109
    %s112 = sphi 0, %s111
    %s126 = sphi 0, %s112
    %s132 = sphi 0, %s134
    %s135 = sphi 0, %s132
    %s136 = sphi 0, %s135
    %s152 = sphi 0, %s136
    %s158 = sphi 0, %s160
    %s161 = sphi 0, %s158
    %s162 = sphi 0, %s161
    %s178 = sphi 0, %s162
  $region4: #{t5_lm_forward.17} parent=0 // loop_header_branch
    %15 = sbr.rel (%p13) target = $region8
  $region5: #{t5_lm_forward.17} parent=0 // loop_body
    %s17 = ssub.s32 %s12, 1
    %s18 = ssub.s32 %s12, 2
    %s19 = sadd.s32 %s12, 1
    %s20 = ssub.s32 %s12, %s19
    %p21 = scmp.eq.s32.totalorder %s20, 0
    %s23 = sadd.s32 %s22, 1
    %s24 = scalar_select %p21, %s22, %s23
    %p27 = pneg %p21
    %p28 = scmp.eq.s32.totalorder %s12, 1
    %p29 = por %p27, %p28
    %p30 = scmp.ne.s32.totalorder %s22, %s25
    %p31 = scmp.eq.s32.totalorder %s12, 0
    %p32 = por %p30, %p31
    %p33 = scmp.ne.s32.totalorder %s22, %s25
    %p34 = scmp.eq.s32.totalorder %s17, 1
    %p35 = por %p33, %p34
    %p36 = scmp.ne.s32.totalorder %s25, %s26
    %p37 = scmp.eq.s32.totalorder %s17, 0
    %p38 = por %p36, %p37
    %p39 = scmp.ne.s32.totalorder %s25, %s26
    %p40 = scmp.eq.s32.totalorder %s18, 1
    %p41 = por %p39, %p40
    %p43 = scmp.ne.s32.totalorder %s26, %s42
    %p44 = scmp.eq.s32.totalorder %s18, 0
    %p45 = por %p43, %p44
    %s47 = sadd.s32 %s46, 1
    %p50 = scmp.eq.s32.totalorder %s12, 1
    %p51 = scmp.ne.s32.totalorder %s46, %s48
    %p52 = scmp.eq.s32.totalorder %s12, 0
    %p53 = por %p51, %p52
    %p54 = scmp.ne.s32.totalorder %s46, %s48
    %p55 = scmp.eq.s32.totalorder %s17, 1
    %p56 = por %p54, %p55
    %p57 = scmp.ne.s32.totalorder %s48, %s49
    %p58 = scmp.eq.s32.totalorder %s17, 0
    %p59 = por %p57, %p58
    %p60 = scmp.ne.s32.totalorder %s48, %s49
    %p61 = scmp.eq.s32.totalorder %s18, 1
    %p62 = por %p60, %p61
    %p64 = scmp.ne.s32.totalorder %s49, %s63
    %p65 = scmp.eq.s32.totalorder %s18, 0
    %p66 = por %p64, %p65
    %s68 = sadd.s32 %s67, 1
    %p71 = scmp.eq.s32.totalorder %s12, 1
    %p72 = scmp.ne.s32.totalorder %s67, %s69
    %p73 = scmp.eq.s32.totalorder %s12, 0
    %p74 = por %p72, %p73
    %p75 = scmp.ne.s32.totalorder %s67, %s69
    %p76 = scmp.eq.s32.totalorder %s17, 1
    %p77 = por %p75, %p76
    %p78 = scmp.ne.s32.totalorder %s69, %s70
    %p79 = scmp.eq.s32.totalorder %s17, 0
    %p80 = por %p78, %p79
    %p81 = scmp.ne.s32.totalorder %s69, %s70
    %p82 = scmp.eq.s32.totalorder %s18, 1
    %p83 = por %p81, %p82
    %p85 = scmp.ne.s32.totalorder %s70, %s84
    %p86 = scmp.eq.s32.totalorder %s18, 0
    %p87 = por %p85, %p86
    %s89 = sadd.s32 %s88, 1
    %p92 = scmp.eq.s32.totalorder %s12, 1
    %p93 = scmp.ne.s32.totalorder %s88, %s90
    %p94 = scmp.eq.s32.totalorder %s12, 0
    %p95 = por %p93, %p94
    %p96 = scmp.ne.s32.totalorder %s88, %s90
    %p97 = scmp.eq.s32.totalorder %s17, 1
    %p98 = por %p96, %p97
    %p99 = scmp.ne.s32.totalorder %s90, %s91
    %p100 = scmp.eq.s32.totalorder %s17, 0
    %p101 = por %p99, %p100
    %p102 = scmp.ne.s32.totalorder %s90, %s91
    %p103 = scmp.eq.s32.totalorder %s18, 1
    %p104 = por %p102, %p103
    %p106 = scmp.ne.s32.totalorder %s91, %s105
    %p107 = scmp.eq.s32.totalorder %s18, 0
    %p108 = por %p106, %p107
    %s110 = sadd.s32 %s109, 1
    %p113 = scmp.eq.s32.totalorder %s12, 1
    %p114 = scmp.ne.s32.totalorder %s109, %s111
    %p115 = scmp.eq.s32.totalorder %s12, 0
    %p116 = por %p114, %p115
    %p117 = scmp.ne.s32.totalorder %s109, %s111
    %p118 = scmp.eq.s32.totalorder %s17, 1
    %p119 = por %p117, %p118
    %p120 = scmp.ne.s32.totalorder %s111, %s112
    %p121 = scmp.eq.s32.totalorder %s17, 0
    %p122 = por %p120, %p121
    %p123 = scmp.ne.s32.totalorder %s111, %s112
    %p124 = scmp.eq.s32.totalorder %s18, 1
    %p125 = por %p123, %p124
    %p127 = scmp.ne.s32.totalorder %s112, %s126
    %p128 = scmp.eq.s32.totalorder %s18, 0
    %p129 = por %p127, %p128
    %s130 = ssub.s32 %s12, %s19
    %p131 = scmp.eq.s32.totalorder %s130, 0
    %s133 = sadd.s32 %s132, 1
    %s134 = scalar_select %p131, %s132, %s133
    %p137 = pneg %p131
    %p138 = scmp.eq.s32.totalorder %s12, 1
    %p139 = por %p137, %p138
    %p140 = scmp.ne.s32.totalorder %s132, %s135
    %p141 = scmp.eq.s32.totalorder %s12, 0
    %p142 = por %p140, %p141
    %p143 = scmp.ne.s32.totalorder %s132, %s135
    %p144 = scmp.eq.s32.totalorder %s17, 1
    %p145 = por %p143, %p144
    %p146 = scmp.ne.s32.totalorder %s135, %s136
    %p147 = scmp.eq.s32.totalorder %s17, 0
    %p148 = por %p146, %p147
    %p149 = scmp.ne.s32.totalorder %s135, %s136
    %p150 = scmp.eq.s32.totalorder %s18, 1
    %p151 = por %p149, %p150
    %p153 = scmp.ne.s32.totalorder %s136, %s152
    %p154 = scmp.eq.s32.totalorder %s18, 0
    %p155 = por %p153, %p154
    %s156 = ssub.s32 %s12, %s19
    %p157 = scmp.eq.s32.totalorder %s156, 0
    %s159 = sadd.s32 %s158, 1
    %s160 = scalar_select %p157, %s158, %s159
    %p163 = pneg %p157
    %p164 = scmp.eq.s32.totalorder %s12, 1
    %p165 = por %p163, %p164
    %p166 = scmp.ne.s32.totalorder %s158, %s161
    %p167 = scmp.eq.s32.totalorder %s12, 0
    %p168 = por %p166, %p167
    %p169 = scmp.ne.s32.totalorder %s158, %s161
    %p170 = scmp.eq.s32.totalorder %s17, 1
    %p171 = por %p169, %p170
    %p172 = scmp.ne.s32.totalorder %s161, %s162
    %p173 = scmp.eq.s32.totalorder %s17, 0
    %p174 = por %p172, %p173
    %p175 = scmp.ne.s32.totalorder %s161, %s162
    %p176 = scmp.eq.s32.totalorder %s18, 1
    %p177 = por %p175, %p176
    %p179 = scmp.ne.s32.totalorder %s162, %s178
    %p180 = scmp.eq.s32.totalorder %s18, 0
    %p181 = por %p179, %p180
    %p182 = scmp.le.s32.totalorder 1, %s12
    %p183 = scmp.lt.s32.totalorder %s12, 3
    %p184 = pnand %p182, %p183
    %p185 = pneg %p184
    // Predicated region
    $region9: #{t5_lm_forward.17} parent=5 // pred_check
      _
    $region10: #{t5_lm_forward.17} parent=5 // pred_check_branch
      %187 = sbr.rel (%p184) target = $region12
    $region11: #{t5_lm_forward.17} parent=5 // pred_region
      %s188 = ssub.s32 %s12, 1
      // Predicated region
      $region13: #{t5_lm_forward.17} parent=11 // pred_check
        %p189 = pneg %p59
      $region14: #{t5_lm_forward.17} parent=11 // pred_check_branch
        %191 = sbr.rel (%p189) target = $region16
      $region15: #{t5_lm_forward.17} parent=11 // pred_region
        _
      $region16: #{t5_lm_forward.17} parent=11 // pred_fallthru
        _
      // Predicated region
      $region17: #{t5_lm_forward.17} parent=11 // pred_check
        %p192 = pneg %p80
      $region18: #{t5_lm_forward.17} parent=11 // pred_check_branch
        %194 = sbr.rel (%p192) target = $region20
      $region19: #{t5_lm_forward.17} parent=11 // pred_region
        _
      $region20: #{t5_lm_forward.17} parent=11 // pred_fallthru
        _
      // Predicated region
      $region21: #{t5_lm_forward.17} parent=11 // pred_check
        %p195 = pneg %p101
      $region22: #{t5_lm_forward.17} parent=11 // pred_check_branch
        %197 = sbr.rel (%p195) target = $region24
      $region23: #{t5_lm_forward.17} parent=11 // pred_region
        _
      $region24: #{t5_lm_forward.17} parent=11 // pred_fallthru
        _
      // Predicated region
      $region25: #{t5_lm_forward.17} parent=11 // pred_check
        %p198 = pneg %p122
      $region26: #{t5_lm_forward.17} parent=11 // pred_check_branch
        %200 = sbr.rel (%p198) target = $region28
      $region27: #{t5_lm_forward.17} parent=11 // pred_region
        _
      $region28: #{t5_lm_forward.17} parent=11 // pred_fallthru
        _
    $region12: #{t5_lm_forward.17} parent=5 // pred_fallthru
      _
    %p201 = scmp.lt.s32.totalorder %s12, 2
    // Predicated region
    $region29: #{t5_lm_forward.17} parent=5 // pred_check
      %p202 = pneg %p201
    $region30: #{t5_lm_forward.17} parent=5 // pred_check_branch
      %204 = sbr.rel (%p202) target = $region32
    $region31: #{t5_lm_forward.17} parent=5 // pred_region
      // Predicated region
      $region33: #{t5_lm_forward.17} parent=31 // pred_check
        %p205 = pneg %p32
      $region34: #{t5_lm_forward.17} parent=31 // pred_check_branch
        %207 = sbr.rel (%p205) target = $region36
      $region35: #{t5_lm_forward.17} parent=31 // pred_region
        %p208 = scmp.lt.s32.totalorder %s12, 1
        %s209 = scalar_select %p208, %s12, 1
        %s210 = smul.addr %s209, 8
        %s211 = scalar_lea.vmem %s0, %s210
      $region36: #{t5_lm_forward.17} parent=31 // pred_fallthru
        _
      // Predicated region
      $region37: #{t5_lm_forward.17} parent=31 // pred_check
        %p212 = pneg %p142
      $region38: #{t5_lm_forward.17} parent=31 // pred_check_branch
        %214 = sbr.rel (%p212) target = $region40
      $region39: #{t5_lm_forward.17} parent=31 // pred_region
        %p215 = scmp.lt.s32.totalorder %s12, 1
        %s216 = scalar_select %p215, %s12, 1
        %s217 = scalar_lea.vmem %s5, %s216
      $region40: #{t5_lm_forward.17} parent=31 // pred_fallthru
        _
    $region32: #{t5_lm_forward.17} parent=5 // pred_fallthru
      _
    %p218 = scmp.le.s32.totalorder 1, %s12
    %p219 = scmp.lt.s32.totalorder %s12, 3
    %p220 = pnand %p218, %p219
    %p221 = pneg %p220
    // Predicated region
    $region41: #{t5_lm_forward.17} parent=5 // pred_check
      _
    $region42: #{t5_lm_forward.17} parent=5 // pred_check_branch
      %223 = sbr.rel (%p220) target = $region44
    $region43: #{t5_lm_forward.17} parent=5 // pred_region
      %s224 = ssub.s32 %s12, 1
      %p225 = scmp.lt.s32.totalorder %s17, 1
      %s226 = scalar_select %p225, %s17, 1
      %s227 = smul.addr %s226, 8
      %s228 = scalar_lea.vmem %s0, %s227
      %p229 = pneg %p38
      %p230 = pneg %p35
      %p231 = pneg %p59
      %p232 = pneg %p56
      %p233 = pneg %p80
      %p234 = pneg %p77
      %p235 = pneg %p101
      %p236 = pneg %p98
      %p237 = pneg %p122
      %p238 = pneg %p119
      %p239 = scmp.lt.s32.totalorder %s17, 1
      %s240 = scalar_select %p239, %s17, 1
      %s241 = scalar_lea.vmem %s5, %s240
      %p242 = pneg %p148
      %p243 = pneg %p145
      %p244 = pneg %p174
      %p245 = pneg %p171
      %p246 = scmp.lt.s32.totalorder %s17, 1
      %s247 = scalar_select %p246, %s17, 1
      %s248 = smul.addr %s247, 8
      %s249 = scalar_lea.vmem %s6, %s248
      %p250 = scmp.lt.s32.totalorder %s17, 1
      %s251 = scalar_select %p250, %s17, 1
      %s252 = smul.addr %s251, 8
      %s253 = scalar_lea.vmem %s0, %s252
      %p254 = scmp.lt.s32.totalorder %s17, 1
      %s255 = scalar_select %p254, %s17, 1
      %s256 = scalar_lea.vmem %s5, %s255
      %p257 = scmp.lt.s32.totalorder %s17, 1
      %s258 = scalar_select %p257, %s17, 1
      %s259 = smul.addr %s258, 8
      %s260 = scalar_lea.vmem %s6, %s259
      %v262 = vld [vmem:[%s253] sm:$0xff]
      %v263 = vmul.f32 %v262, %v262
      %vm264 = vcmask 261120
      %v265 = vsel %vm264, %v263, 0.0
      %266 = vadd.xlane.f32.xlu0 %v265
      %v267 = vpop.xlane.xlu0 %266
      %v268 = vrcp.pop 32.0
      %v269 = vmul.f32 32.0, %v268
      %v270 = vsub.f32 1.0, %v269
      %v271 = vmul.f32 %v268, %v270
      %v272 = vadd.f32 %v268, %v271
      %vm273 = vweird.f32 %v268
      %v274 = vsel %vm273, %v268, %v272
      %v275 = vmul.f32 %v267, %v274
      %v276 = vadd.f32 %v275, 1e-06
      %v277 = vrsqrt.pop %v276
      %v278 = vmul.f32 %v277, %v276
      %v279 = vmul.f32 %v278, %v277
      %v280 = vmul.f32 0.5, %v279
      %v281 = vsub.f32 1.5, %v280
      %v282 = vmul.f32 %v277, %v281
      %vm283 = vweird.f32 %v276
      %vm284 = vweird.f32 %v277
      %vm285 = vmor %vm283, %vm284
      %v286 = vsel %vm285, %v277, %v282
      %v287 = vmul.f32 %v262, %v286
      %v288 = vld [vmem:[%s1] sm:$0x1]
      %v290 = vperm.slane %v288, 0
      %v292 = vmul.f32 %v287, %v290
      %v293 = vpack.c.bf16 %v292, %v292
      %v294 = vld [vmem:[%s2] sm:$0xf]
      %v295 = vld [vmem:[%s2 + $0x4] sm:$0xf]
      %v296 = vld [vmem:[%s2 + $0x8] sm:$0xf]
      %v297 = vld [vmem:[%s2 + $0xc] sm:$0xf]
      %v302 = vunpack.c.l.b16 %v294
      %v303 = vunpack.c.l.b16 %v295
      %v304 = vunpack.c.l.b16 %v296
      %v305 = vunpack.c.l.b16 %v297
      %v306 = vpack.c.b16 %v303, %v302
      %v307 = vpack.c.b16 %v305, %v304
      %v311 = vsel %vm264, %v293, 0
      %313 = vmatpush.bf16.msra.mxu0 0
      %314 = vmatpush.bf16.msra.mxu0 0
      %315 = vmatpush.bf16.msra.mxu0 0
      %316 = vmatpush.bf16.msra.mxu0 0
      %317 = vmatpush.bf16.msra.mxu0 0
      %318 = vmatpush.bf16.msra.mxu0 0
      %319 = vmatpush.bf16.msra.mxu0 %v307
      %320 = vmatpush.bf16.msra.mxu0 %v306
      %321 = vmatmul.bf16.gmra.mxu0 %v311
      %v322 = vpop.f32.mrf.mxu0
      %v323 = vadd.f32 0.0, %v322
      %v324 = vpop.f32.mrf.mxu0
      %325 = vdwg.mxu0
      %v326 = vld [vmem:[%s4] sm:$0xff]
      %v327 = vld [vmem:[%s4 + $0x8] sm:$0xff]
      %v328 = vld [vmem:[%s4 + $0x10] sm:$0xff]
      %v329 = vld [vmem:[%s4 + $0x18] sm:$0xff]
      %v330 = vld [vmem:[%s256] sm:$0x1]
      %v331 = vpack.c.bf16 %v323, %v323
      %333 = vrot.lane.b32.xlu0 %v331, 96
      %v334 = vpop.permute.xlu0 %333
      %vm335 = vcmask 64512
      %v337 = vsel %vm335, %v331, 0
      %v340 = vsel %vm335, %v334, 0
      %342 = vmatpush.bf16.xpose.msra.mxu0 0
      %343 = vmatpush.bf16.xpose.msra.mxu0 0
      %344 = vmatpush.bf16.xpose.msra.mxu0 0
      %345 = vmatpush.bf16.xpose.msra.mxu0 0
      %346 = vmatpush.bf16.xpose.msra.mxu0 0
      %347 = vmatpush.bf16.xpose.msra.mxu0 0
      %348 = vmatpush.bf16.xpose.msra.mxu0 0
      %349 = vmatpush.bf16.xpose.msra.mxu0 %v340
      %350 = vmatmul.bf16.gmra.mxu0 %v337
      %v351 = vpop.f32.mrf.mxu0
      %v352 = vadd.f32 %v326, %v351
      %v353 = vpop.f32.mrf.mxu0
      %354 = vdwg.mxu0
      %v356 = vperm.slane %v330, 0
      %v358 = vadd.f32 %v352, %v356
      %v359 = vsel %vm335, %v358, -inf
      %360 = vmax.xlane.f32.xlu0 %v359
      %v361 = vpop.xlane.xlu0 %360
      %v362 = vsub.f32 %v358, %v361
      %v363 = vmul.f32 %v362, 1.442695
      %v364 = vpow.pop %v363
      %v365 = vsel %vm335, %v364, 0.0
      %366 = vadd.xlane.f32.xlu0 %v365
      %v367 = vpop.xlane.xlu0 %366
      %v368 = vrcp.pop %v367
      %v369 = vmul.f32 %v364, %v368
      %v370 = vpack.c.bf16 %v369, %v369
      %371 = vrot.lane.b32.xlu0 %v331, 64
      %v372 = vpop.permute.xlu0 %371
      %v374 = vsel %vm335, %v370, 0
      %vm376 = vcmask 1043456
      %v378 = vsel %vm376, %v372, 0
      %380 = vmatpush.bf16.msra.mxu0 0
      %381 = vmatpush.bf16.msra.mxu0 0
      %382 = vmatpush.bf16.msra.mxu0 0
      %383 = vmatpush.bf16.msra.mxu0 0
      %384 = vmatpush.bf16.msra.mxu0 0
      %385 = vmatpush.bf16.msra.mxu0 0
      %386 = vmatpush.bf16.msra.mxu0 0
      %387 = vmatpush.bf16.msra.mxu0 %v378
      %388 = vmatmul.bf16.gmra.mxu0 %v374
      %v389 = vpop.f32.mrf.mxu0
      %v390 = vadd.f32 0.0, %v389
      %v391 = vpop.f32.mrf.mxu0
      %392 = vdwg.mxu0
      %393 = vrot.lane.b32.xlu0 %v331, 120
      %v394 = vpop.permute.xlu0 %393
      %395 = vrot.lane.b32.xlu0 %v331, 88
      %v396 = vpop.permute.xlu0 %395
      %v398 = vsel %vm335, %v394, 0
      %v401 = vsel %vm335, %v396, 0
      %403 = vmatpush.bf16.xpose.msra.mxu0 0
      %404 = vmatpush.bf16.xpose.msra.mxu0 0
      %405 = vmatpush.bf16.xpose.msra.mxu0 0
      %406 = vmatpush.bf16.xpose.msra.mxu0 0
      %407 = vmatpush.bf16.xpose.msra.mxu0 0
      %408 = vmatpush.bf16.xpose.msra.mxu0 0
      %409 = vmatpush.bf16.xpose.msra.mxu0 0
      %410 = vmatpush.bf16.xpose.msra.mxu0 %v401
      %411 = vmatmul.bf16.gmra.mxu0 %v398
      %v412 = vpop.f32.mrf.mxu0
      %v413 = vadd.f32 %v327, %v412
      %v414 = vpop.f32.mrf.mxu0
      %415 = vdwg.mxu0
      %v416 = vadd.f32 %v413, %v356
      %v417 = vsel %vm335, %v416, -inf
      %418 = vmax.xlane.f32.xlu0 %v417
      %v419 = vpop.xlane.xlu0 %418
      %v420 = vsub.f32 %v416, %v419
      %v421 = vmul.f32 %v420, 1.442695
      %v422 = vpow.pop %v421
      %v423 = vsel %vm335, %v422, 0.0
      %424 = vadd.xlane.f32.xlu0 %v423
      %v425 = vpop.xlane.xlu0 %424
      %v426 = vrcp.pop %v425
      %v427 = vmul.f32 %v422, %v426
      %v428 = vpack.c.bf16 %v427, %v427
      %429 = vrot.lane.b32.xlu0 %v331, 56
      %v430 = vpop.permute.xlu0 %429
      %v432 = vsel %vm335, %v428, 0
      %v435 = vsel %vm376, %v430, 0
      %437 = vmatpush.bf16.msra.mxu0 0
      %438 = vmatpush.bf16.msra.mxu0 0
      %439 = vmatpush.bf16.msra.mxu0 0
      %440 = vmatpush.bf16.msra.mxu0 0
      %441 = vmatpush.bf16.msra.mxu0 0
      %442 = vmatpush.bf16.msra.mxu0 0
      %443 = vmatpush.bf16.msra.mxu0 0
      %444 = vmatpush.bf16.msra.mxu0 %v435
      %445 = vmatmul.bf16.gmra.mxu0 %v432
      %v446 = vpop.f32.mrf.mxu0
      %v447 = vadd.f32 0.0, %v446
      %v448 = vpop.f32.mrf.mxu0
      %449 = vdwg.mxu0
      %450 = vrot.lane.b32.xlu0 %v331, 112
      %v451 = vpop.permute.xlu0 %450
      %452 = vrot.lane.b32.xlu0 %v331, 80
      %v453 = vpop.permute.xlu0 %452
      %v455 = vsel %vm335, %v451, 0
      %v458 = vsel %vm335, %v453, 0
      %460 = vmatpush.bf16.xpose.msra.mxu0 0
      %461 = vmatpush.bf16.xpose.msra.mxu0 0
      %462 = vmatpush.bf16.xpose.msra.mxu0 0
      %463 = vmatpush.bf16.xpose.msra.mxu0 0
      %464 = vmatpush.bf16.xpose.msra.mxu0 0
      %465 = vmatpush.bf16.xpose.msra.mxu0 0
      %466 = vmatpush.bf16.xpose.msra.mxu0 0
      %467 = vmatpush.bf16.xpose.msra.mxu0 %v458
      %468 = vmatmul.bf16.gmra.mxu0 %v455
      %v469 = vpop.f32.mrf.mxu0
      %v470 = vadd.f32 %v328, %v469
      %v471 = vpop.f32.mrf.mxu0
      %472 = vdwg.mxu0
      %v473 = vadd.f32 %v470, %v356
      %v474 = vsel %vm335, %v473, -inf
      %475 = vmax.xlane.f32.xlu0 %v474
      %v476 = vpop.xlane.xlu0 %475
      %v477 = vsub.f32 %v473, %v476
      %v478 = vmul.f32 %v477, 1.442695
      %v479 = vpow.pop %v478
      %v480 = vsel %vm335, %v479, 0.0
      %481 = vadd.xlane.f32.xlu0 %v480
      %v482 = vpop.xlane.xlu0 %481
      %v483 = vrcp.pop %v482
      %v484 = vmul.f32 %v479, %v483
      %v485 = vpack.c.bf16 %v484, %v484
      %486 = vrot.lane.b32.xlu0 %v331, 48
      %v487 = vpop.permute.xlu0 %486
      %v489 = vsel %vm335, %v485, 0
      %v492 = vsel %vm376, %v487, 0
      %494 = vmatpush.bf16.msra.mxu0 0
      %495 = vmatpush.bf16.msra.mxu0 0
      %496 = vmatpush.bf16.msra.mxu0 0
      %497 = vmatpush.bf16.msra.mxu0 0
      %498 = vmatpush.bf16.msra.mxu0 0
      %499 = vmatpush.bf16.msra.mxu0 0
      %500 = vmatpush.bf16.msra.mxu0 0
      %501 = vmatpush.bf16.msra.mxu0 %v492
      %502 = vmatmul.bf16.gmra.mxu0 %v489
      %v503 = vpop.f32.mrf.mxu0
      %v504 = vadd.f32 0.0, %v503
      %v505 = vpop.f32.mrf.mxu0
      %506 = vdwg.mxu0
      %507 = vrot.lane.b32.xlu0 %v331, 104
      %v508 = vpop.permute.xlu0 %507
      %509 = vrot.lane.b32.xlu0 %v331, 72
      %v510 = vpop.permute.xlu0 %509
      %v512 = vsel %vm335, %v508, 0
      %v515 = vsel %vm335, %v510, 0
      %517 = vmatpush.bf16.xpose.msra.mxu0 0
      %518 = vmatpush.bf16.xpose.msra.mxu0 0
      %519 = vmatpush.bf16.xpose.msra.mxu0 0
      %520 = vmatpush.bf16.xpose.msra.mxu0 0
      %521 = vmatpush.bf16.xpose.msra.mxu0 0
      %522 = vmatpush.bf16.xpose.msra.mxu0 0
      %523 = vmatpush.bf16.xpose.msra.mxu0 0
      %524 = vmatpush.bf16.xpose.msra.mxu0 %v515
      %525 = vmatmul.bf16.gmra.mxu0 %v512
      %v526 = vpop.f32.mrf.mxu0
      %v527 = vadd.f32 %v329, %v526
      %v528 = vpop.f32.mrf.mxu0
      %529 = vdwg.mxu0
      %v530 = vadd.f32 %v527, %v356
      %v531 = vsel %vm335, %v530, -inf
      %532 = vmax.xlane.f32.xlu0 %v531
      %v533 = vpop.xlane.xlu0 %532
      %v534 = vsub.f32 %v530, %v533
      %v535 = vmul.f32 %v534, 1.442695
      %v536 = vpow.pop %v535
      %v537 = vsel %vm335, %v536, 0.0
      %538 = vadd.xlane.f32.xlu0 %v537
      %v539 = vpop.xlane.xlu0 %538
      %v540 = vrcp.pop %v539
      %v541 = vmul.f32 %v536, %v540
      %v542 = vpack.c.bf16 %v541, %v541
      %543 = vrot.lane.b32.xlu0 %v331, 40
      %v544 = vpop.permute.xlu0 %543
      %v546 = vsel %vm335, %v542, 0
      %v549 = vsel %vm376, %v544, 0
      %551 = vmatpush.bf16.msra.mxu0 0
      %552 = vmatpush.bf16.msra.mxu0 0
      %553 = vmatpush.bf16.msra.mxu0 0
      %554 = vmatpush.bf16.msra.mxu0 0
      %555 = vmatpush.bf16.msra.mxu0 0
      %556 = vmatpush.bf16.msra.mxu0 0
      %557 = vmatpush.bf16.msra.mxu0 0
      %558 = vmatpush.bf16.msra.mxu0 %v549
      %559 = vmatmul.bf16.gmra.mxu0 %v546
      %v560 = vpop.f32.mrf.mxu0
      %v561 = vadd.f32 0.0, %v560
      %v562 = vpop.f32.mrf.mxu0
      %563 = vdwg.mxu0
      %565 = vrot.lane.b32.xlu0 %v447, 8
      %v566 = vpop.permute.xlu0 %565
      %569 = vrot.lane.b32.xlu0 %v504, 16
      %v570 = vpop.permute.xlu0 %569
      %573 = vrot.lane.b32.xlu0 %v561, 24
      %v574 = vpop.permute.xlu0 %573
      %v576 = vsel %vm335, %v390, %v566
      %vm577 = vcmask 130048
      %v578 = vsel %vm577, %v576, %v570
      %vm579 = vcmask 195584
      %v580 = vsel %vm579, %v578, %v574
      %v581 = vpack.c.bf16 %v580, %v580
      %v582 = vld [vmem:[%s3] sm:$0xf]
      %v583 = vld [vmem:[%s3 + $0x4] sm:$0xf]
      %v584 = vld [vmem:[%s3 + $0x8] sm:$0xf]
      %v585 = vld [vmem:[%s3 + $0xc] sm:$0xf]
      %v590 = vunpack.c.l.b16 %v582
      %v591 = vunpack.c.l.b16 %v583
      %v592 = vunpack.c.l.b16 %v584
      %v593 = vunpack.c.l.b16 %v585
      %v594 = vpack.c.b16 %v591, %v590
      %v595 = vpack.c.b16 %v593, %v592
      %v599 = vsel %vm264, %v581, 0
      %601 = vmatpush.bf16.msra.mxu0 0
      %602 = vmatpush.bf16.msra.mxu0 0
      %603 = vmatpush.bf16.msra.mxu0 0
      %604 = vmatpush.bf16.msra.mxu0 0
      %605 = vmatpush.bf16.msra.mxu0 0
      %606 = vmatpush.bf16.msra.mxu0 0
      %607 = vmatpush.bf16.msra.mxu0 %v595
      %608 = vmatpush.bf16.msra.mxu0 %v594
      %609 = vmatmul.bf16.gmra.mxu0 %v599
      %v610 = vpop.f32.mrf.mxu0
      %v611 = vadd.f32 0.0, %v610
      %v612 = vpop.f32.mrf.mxu0
      %613 = vdwg.mxu0
      %v614 = vadd.f32 %v262, %v611
      %615 = vst.msk [vmem:[%s260] sm:$0xff] %vm264, %v614
      %p616 = scmp.lt.s32.totalorder %s17, 1
      %s617 = scalar_select %p616, %s17, 1
      %s618 = smul.addr %s617, 8
      %s619 = scalar_lea.vmem %s6, %s618
      // Predicated region
      $region45: #{t5_lm_forward.17} parent=43 // pred_check
        %p620 = pneg %p171
      $region46: #{t5_lm_forward.17} parent=43 // pred_check_branch
        %622 = sbr.rel (%p620) target = $region48
      $region47: #{t5_lm_forward.17} parent=43 // pred_region
        _
      $region48: #{t5_lm_forward.17} parent=43 // pred_fallthru
        _
    $region44: #{t5_lm_forward.17} parent=5 // pred_fallthru
      _
    %p623 = scmp.le.s32.totalorder 2, %s12
    // Predicated region
    $region49: #{t5_lm_forward.17} parent=5 // pred_check
      %p624 = pneg %p623
    $region50: #{t5_lm_forward.17} parent=5 // pred_check_branch
      %626 = sbr.rel (%p624) target = $region52
    $region51: #{t5_lm_forward.17} parent=5 // pred_region
      %s627 = ssub.s32 %s12, 2
      // Predicated region
      $region53: #{t5_lm_forward.17} parent=51 // pred_check
        %p628 = pneg %p177
      $region54: #{t5_lm_forward.17} parent=51 // pred_check_branch
        %630 = sbr.rel (%p628) target = $region56
      $region55: #{t5_lm_forward.17} parent=51 // pred_region
        %p631 = scmp.lt.s32.totalorder %s18, 1
        %s632 = scalar_select %p631, %s18, 1
        %s633 = smul.addr %s632, 8
        %s634 = scalar_lea.vmem %s6, %s633
      $region56: #{t5_lm_forward.17} parent=51 // pred_fallthru
        _
    $region52: #{t5_lm_forward.17} parent=5 // pred_fallthru
      _
  $region6: #{t5_lm_forward.17} parent=0 // loop_footer
    %s16 = sadd.s32 1, %s12
  $region7: #{t5_lm_forward.17} parent=0 // loop_footer_branch
    %11 = sbr.rel target = $region3
  $region8: #{t5_lm_forward.17} parent=0 // loop_exit
    _

// kernel: t5_lm_forward.18
$region0: #{t5_lm_forward.18}
  #allocation0 [shape = 'u32[]', space=smem, size = 0x4, offset = 0x4, fixed_abs, tag = 'smem constant byte address 0x4 - core index']
  #allocation1 [shape = 'u32[72,128]{1,0:T(1,128)}', space=vmem, size = 0x9000, scoped, tag = 'internal scratch']
  %s0 = inlined_call_operand.vmem [shape: f32[2,8,32], index: 0, kind: input, shape index: {}]
  %s1 = inlined_call_operand.vmem [shape: f32[2,8,32], index: 1, kind: input, shape index: {}]
  %s2 = inlined_call_operand.vmem [shape: f32[1,32], index: 2, kind: input, shape index: {}]
  %s3 = inlined_call_operand.vmem [shape: bf16[32,32], index: 3, kind: input, shape index: {}]
  %s4 = inlined_call_operand.vmem [shape: bf16[32,64], index: 4, kind: input, shape index: {}]
  %s5 = inlined_call_operand.vmem [shape: bf16[32,32], index: 5, kind: input, shape index: {}]
  %s6 = inlined_call_operand.vmem [shape: f32[2,1,8], index: 6, kind: input, shape index: {}]
  %s7 = inlined_call_operand.vmem [shape: f32[2,8,32], index: 7, kind: output, shape index: {}]
  %s8 = sld [smem:[#allocation0]]
  $region61: #{t5_lm_forward.18} parent=0
    _
  %s10 = ssub.s32 1, %s8
  %s11 = scalar_select 0, %s10, %s8
  loop: start=0, step=1, limit=4
  $region2: #{t5_lm_forward.18} parent=0 // loop_pre_header
    _
  $region3: #{t5_lm_forward.18} parent=0 // loop_header
    %s13 = sphi 0, %s17
    %p14 = scmp.ge.s32.totalorder %s13, 4
    %s23 = sphi 0, %s25
    %s26 = sphi 0, %s23
    %s27 = sphi 0, %s26
    %s43 = sphi 0, %s27
    %s49 = sphi 0, %s51
    %s52 = sphi 0, %s49
    %s53 = sphi 0, %s52
    %s69 = sphi 0, %s53
    %s73 = sphi 0, %s73
    %s75 = sphi 0, %s73
    %s76 = sphi 0, %s75
    %s90 = sphi 0, %s76
    %s94 = sphi 0, %s94
    %s96 = sphi 0, %s94
    %s97 = sphi 0, %s96
    %s111 = sphi 0, %s97
    %s115 = sphi 0, %s115
    %s117 = sphi 0, %s115
    %s118 = sphi 0, %s117
    %s132 = sphi 0, %s118
    %s136 = sphi 0, %s136
    %s138 = sphi 0, %s136
    %s139 = sphi 0, %s138
    %s153 = sphi 0, %s139
    %s159 = sphi 0, %s161
    %s162 = sphi 0, %s159
    %s163 = sphi 0, %s162
    %s179 = sphi 0, %s163
    %s185 = sphi 0, %s187
    %s188 = sphi 0, %s185
    %s189 = sphi 0, %s188
    %s205 = sphi 0, %s189
  $region4: #{t5_lm_forward.18} parent=0 // loop_header_branch
    %16 = sbr.rel (%p14) target = $region8
  $region5: #{t5_lm_forward.18} parent=0 // loop_body
    %s18 = ssub.s32 %s13, 1
    %s19 = ssub.s32 %s13, 2
    %s20 = sadd.s32 %s13, 1
    %s21 = ssub.s32 %s13, %s20
    %p22 = scmp.eq.s32.totalorder %s21, 0
    %s24 = sadd.s32 %s23, 1
    %s25 = scalar_select %p22, %s23, %s24
    %p28 = pneg %p22
    %p29 = scmp.eq.s32.totalorder %s13, 1
    %p30 = por %p28, %p29
    %p31 = scmp.ne.s32.totalorder %s23, %s26
    %p32 = scmp.eq.s32.totalorder %s13, 0
    %p33 = por %p31, %p32
    %p34 = scmp.ne.s32.totalorder %s23, %s26
    %p35 = scmp.eq.s32.totalorder %s18, 1
    %p36 = por %p34, %p35
    %p37 = scmp.ne.s32.totalorder %s26, %s27
    %p38 = scmp.eq.s32.totalorder %s18, 0
    %p39 = por %p37, %p38
    %p40 = scmp.ne.s32.totalorder %s26, %s27
    %p41 = scmp.eq.s32.totalorder %s19, 1
    %p42 = por %p40, %p41
    %p44 = scmp.ne.s32.totalorder %s27, %s43
    %p45 = scmp.eq.s32.totalorder %s19, 0
    %p46 = por %p44, %p45
    %s47 = ssub.s32 %s13, %s20
    %p48 = scmp.eq.s32.totalorder %s47, 0
    %s50 = sadd.s32 %s49, 1
    %s51 = scalar_select %p48, %s49, %s50
    %p54 = pneg %p48
    %p55 = scmp.eq.s32.totalorder %s13, 1
    %p56 = por %p54, %p55
    %p57 = scmp.ne.s32.totalorder %s49, %s52
    %p58 = scmp.eq.s32.totalorder %s13, 0
    %p59 = por %p57, %p58
    %p60 = scmp.ne.s32.totalorder %s49, %s52
    %p61 = scmp.eq.s32.totalorder %s18, 1
    %p62 = por %p60, %p61
    %p63 = scmp.ne.s32.totalorder %s52, %s53
    %p64 = scmp.eq.s32.totalorder %s18, 0
    %p65 = por %p63, %p64
    %p66 = scmp.ne.s32.totalorder %s52, %s53
    %p67 = scmp.eq.s32.totalorder %s19, 1
    %p68 = por %p66, %p67
    %p70 = scmp.ne.s32.totalorder %s53, %s69
    %p71 = scmp.eq.s32.totalorder %s19, 0
    %p72 = por %p70, %p71
    %s74 = sadd.s32 %s73, 1
    %p77 = scmp.eq.s32.totalorder %s13, 1
    %p78 = scmp.ne.s32.totalorder %s73, %s75
    %p79 = scmp.eq.s32.totalorder %s13, 0
    %p80 = por %p78, %p79
    %p81 = scmp.ne.s32.totalorder %s73, %s75
    %p82 = scmp.eq.s32.totalorder %s18, 1
    %p83 = por %p81, %p82
    %p84 = scmp.ne.s32.totalorder %s75, %s76
    %p85 = scmp.eq.s32.totalorder %s18, 0
    %p86 = por %p84, %p85
    %p87 = scmp.ne.s32.totalorder %s75, %s76
    %p88 = scmp.eq.s32.totalorder %s19, 1
    %p89 = por %p87, %p88
    %p91 = scmp.ne.s32.totalorder %s76, %s90
    %p92 = scmp.eq.s32.totalorder %s19, 0
    %p93 = por %p91, %p92
    %s95 = sadd.s32 %s94, 1
    %p98 = scmp.eq.s32.totalorder %s13, 1
    %p99 = scmp.ne.s32.totalorder %s94, %s96
    %p100 = scmp.eq.s32.totalorder %s13, 0
    %p101 = por %p99, %p100
    %p102 = scmp.ne.s32.totalorder %s94, %s96
    %p103 = scmp.eq.s32.totalorder %s18, 1
    %p104 = por %p102, %p103
    %p105 = scmp.ne.s32.totalorder %s96, %s97
    %p106 = scmp.eq.s32.totalorder %s18, 0
    %p107 = por %p105, %p106
    %p108 = scmp.ne.s32.totalorder %s96, %s97
    %p109 = scmp.eq.s32.totalorder %s19, 1
    %p110 = por %p108, %p109
    %p112 = scmp.ne.s32.totalorder %s97, %s111
    %p113 = scmp.eq.s32.totalorder %s19, 0
    %p114 = por %p112, %p113
    %s116 = sadd.s32 %s115, 1
    %p119 = scmp.eq.s32.totalorder %s13, 1
    %p120 = scmp.ne.s32.totalorder %s115, %s117
    %p121 = scmp.eq.s32.totalorder %s13, 0
    %p122 = por %p120, %p121
    %p123 = scmp.ne.s32.totalorder %s115, %s117
    %p124 = scmp.eq.s32.totalorder %s18, 1
    %p125 = por %p123, %p124
    %p126 = scmp.ne.s32.totalorder %s117, %s118
    %p127 = scmp.eq.s32.totalorder %s18, 0
    %p128 = por %p126, %p127
    %p129 = scmp.ne.s32.totalorder %s117, %s118
    %p130 = scmp.eq.s32.totalorder %s19, 1
    %p131 = por %p129, %p130
    %p133 = scmp.ne.s32.totalorder %s118, %s132
    %p134 = scmp.eq.s32.totalorder %s19, 0
    %p135 = por %p133, %p134
    %s137 = sadd.s32 %s136, 1
    %p140 = scmp.eq.s32.totalorder %s13, 1
    %p141 = scmp.ne.s32.totalorder %s136, %s138
    %p142 = scmp.eq.s32.totalorder %s13, 0
    %p143 = por %p141, %p142
    %p144 = scmp.ne.s32.totalorder %s136, %s138
    %p145 = scmp.eq.s32.totalorder %s18, 1
    %p146 = por %p144, %p145
    %p147 = scmp.ne.s32.totalorder %s138, %s139
    %p148 = scmp.eq.s32.totalorder %s18, 0
    %p149 = por %p147, %p148
    %p150 = scmp.ne.s32.totalorder %s138, %s139
    %p151 = scmp.eq.s32.totalorder %s19, 1
    %p152 = por %p150, %p151
    %p154 = scmp.ne.s32.totalorder %s139, %s153
    %p155 = scmp.eq.s32.totalorder %s19, 0
    %p156 = por %p154, %p155
    %s157 = ssub.s32 %s13, %s20
    %p158 = scmp.eq.s32.totalorder %s157, 0
    %s160 = sadd.s32 %s159, 1
    %s161 = scalar_select %p158, %s159, %s160
    %p164 = pneg %p158
    %p165 = scmp.eq.s32.totalorder %s13, 1
    %p166 = por %p164, %p165
    %p167 = scmp.ne.s32.totalorder %s159, %s162
    %p168 = scmp.eq.s32.totalorder %s13, 0
    %p169 = por %p167, %p168
    %p170 = scmp.ne.s32.totalorder %s159, %s162
    %p171 = scmp.eq.s32.totalorder %s18, 1
    %p172 = por %p170, %p171
    %p173 = scmp.ne.s32.totalorder %s162, %s163
    %p174 = scmp.eq.s32.totalorder %s18, 0
    %p175 = por %p173, %p174
    %p176 = scmp.ne.s32.totalorder %s162, %s163
    %p177 = scmp.eq.s32.totalorder %s19, 1
    %p178 = por %p176, %p177
    %p180 = scmp.ne.s32.totalorder %s163, %s179
    %p181 = scmp.eq.s32.totalorder %s19, 0
    %p182 = por %p180, %p181
    %s183 = ssub.s32 %s13, %s20
    %p184 = scmp.eq.s32.totalorder %s183, 0
    %s186 = sadd.s32 %s185, 1
    %s187 = scalar_select %p184, %s185, %s186
    %p190 = pneg %p184
    %p191 = scmp.eq.s32.totalorder %s13, 1
    %p192 = por %p190, %p191
    %p193 = scmp.ne.s32.totalorder %s185, %s188
    %p194 = scmp.eq.s32.totalorder %s13, 0
    %p195 = por %p193, %p194
    %p196 = scmp.ne.s32.totalorder %s185, %s188
    %p197 = scmp.eq.s32.totalorder %s18, 1
    %p198 = por %p196, %p197
    %p199 = scmp.ne.s32.totalorder %s188, %s189
    %p200 = scmp.eq.s32.totalorder %s18, 0
    %p201 = por %p199, %p200
    %p202 = scmp.ne.s32.totalorder %s188, %s189
    %p203 = scmp.eq.s32.totalorder %s19, 1
    %p204 = por %p202, %p203
    %p206 = scmp.ne.s32.totalorder %s189, %s205
    %p207 = scmp.eq.s32.totalorder %s19, 0
    %p208 = por %p206, %p207
    %p209 = scmp.le.s32.totalorder 1, %s13
    %p210 = scmp.lt.s32.totalorder %s13, 3
    %p211 = pnand %p209, %p210
    %p212 = pneg %p211
    // Predicated region
    $region9: #{t5_lm_forward.18} parent=5 // pred_check
      _
    $region10: #{t5_lm_forward.18} parent=5 // pred_check_branch
      %214 = sbr.rel (%p211) target = $region12
    $region11: #{t5_lm_forward.18} parent=5 // pred_region
      %s215 = ssub.s32 %s13, 1
      // Predicated region
      $region13: #{t5_lm_forward.18} parent=11 // pred_check
        %p216 = pneg %p86
      $region14: #{t5_lm_forward.18} parent=11 // pred_check_branch
        %218 = sbr.rel (%p216) target = $region16
      $region15: #{t5_lm_forward.18} parent=11 // pred_region
        _
      $region16: #{t5_lm_forward.18} parent=11 // pred_fallthru
        _
      // Predicated region
      $region17: #{t5_lm_forward.18} parent=11 // pred_check
        %p219 = pneg %p107
      $region18: #{t5_lm_forward.18} parent=11 // pred_check_branch
        %221 = sbr.rel (%p219) target = $region20
      $region19: #{t5_lm_forward.18} parent=11 // pred_region
        _
      $region20: #{t5_lm_forward.18} parent=11 // pred_fallthru
        _
      // Predicated region
      $region21: #{t5_lm_forward.18} parent=11 // pred_check
        %p222 = pneg %p128
      $region22: #{t5_lm_forward.18} parent=11 // pred_check_branch
        %224 = sbr.rel (%p222) target = $region24
      $region23: #{t5_lm_forward.18} parent=11 // pred_region
        _
      $region24: #{t5_lm_forward.18} parent=11 // pred_fallthru
        _
      // Predicated region
      $region25: #{t5_lm_forward.18} parent=11 // pred_check
        %p225 = pneg %p149
      $region26: #{t5_lm_forward.18} parent=11 // pred_check_branch
        %227 = sbr.rel (%p225) target = $region28
      $region27: #{t5_lm_forward.18} parent=11 // pred_region
        _
      $region28: #{t5_lm_forward.18} parent=11 // pred_fallthru
        _
    $region12: #{t5_lm_forward.18} parent=5 // pred_fallthru
      _
    %p228 = scmp.lt.s32.totalorder %s13, 2
    // Predicated region
    $region29: #{t5_lm_forward.18} parent=5 // pred_check
      %p229 = pneg %p228
    $region30: #{t5_lm_forward.18} parent=5 // pred_check_branch
      %231 = sbr.rel (%p229) target = $region32
    $region31: #{t5_lm_forward.18} parent=5 // pred_region
      // Predicated region
      $region33: #{t5_lm_forward.18} parent=31 // pred_check
        %p232 = pneg %p33
      $region34: #{t5_lm_forward.18} parent=31 // pred_check_branch
        %234 = sbr.rel (%p232) target = $region36
      $region35: #{t5_lm_forward.18} parent=31 // pred_region
        %p235 = scmp.lt.s32.totalorder %s13, 1
        %s236 = scalar_select %p235, %s13, 1
        %s237 = smul.addr %s236, 8
        %s238 = scalar_lea.vmem %s0, %s237
      $region36: #{t5_lm_forward.18} parent=31 // pred_fallthru
        _
      // Predicated region
      $region37: #{t5_lm_forward.18} parent=31 // pred_check
        %p239 = pneg %p59
      $region38: #{t5_lm_forward.18} parent=31 // pred_check_branch
        %241 = sbr.rel (%p239) target = $region40
      $region39: #{t5_lm_forward.18} parent=31 // pred_region
        %p242 = scmp.lt.s32.totalorder %s13, 1
        %s243 = scalar_select %p242, %s13, 1
        %s244 = smul.addr %s243, 8
        %s245 = scalar_lea.vmem %s1, %s244
      $region40: #{t5_lm_forward.18} parent=31 // pred_fallthru
        _
      // Predicated region
      $region41: #{t5_lm_forward.18} parent=31 // pred_check
        %p246 = pneg %p169
      $region42: #{t5_lm_forward.18} parent=31 // pred_check_branch
        %248 = sbr.rel (%p246) target = $region44
      $region43: #{t5_lm_forward.18} parent=31 // pred_region
        %p249 = scmp.lt.s32.totalorder %s13, 1
        %s250 = scalar_select %p249, %s13, 1
        %s251 = scalar_lea.vmem %s6, %s250
      $region44: #{t5_lm_forward.18} parent=31 // pred_fallthru
        _
    $region32: #{t5_lm_forward.18} parent=5 // pred_fallthru
      _
    %p252 = scmp.le.s32.totalorder 1, %s13
    %p253 = scmp.lt.s32.totalorder %s13, 3
    %p254 = pnand %p252, %p253
    %p255 = pneg %p254
    // Predicated region
    $region45: #{t5_lm_forward.18} parent=5 // pred_check
      _
    $region46: #{t5_lm_forward.18} parent=5 // pred_check_branch
      %257 = sbr.rel (%p254) target = $region48
    $region47: #{t5_lm_forward.18} parent=5 // pred_region
      %s258 = ssub.s32 %s13, 1
      %p259 = scmp.lt.s32.totalorder %s18, 1
      %s260 = scalar_select %p259, %s18, 1
      %s261 = smul.addr %s260, 8
      %s262 = scalar_lea.vmem %s0, %s261
      %p263 = pneg %p39
      %p264 = pneg %p36
      %p265 = scmp.lt.s32.totalorder %s18, 1
      %s266 = scalar_select %p265, %s18, 1
      %s267 = smul.addr %s266, 8
      %s268 = scalar_lea.vmem %s1, %s267
      %p269 = pneg %p65
      %p270 = pneg %p62
      %p271 = pneg %p86
      %p272 = pneg %p83
      %p273 = pneg %p107
      %p274 = pneg %p104
      %p275 = pneg %p128
      %p276 = pneg %p125
      %p277 = pneg %p149
      %p278 = pneg %p146
      %p279 = scmp.lt.s32.totalorder %s18, 1
      %s280 = scalar_select %p279, %s18, 1
      %s281 = scalar_lea.vmem %s6, %s280
      %p282 = pneg %p175
      %p283 = pneg %p172
      %p284 = pneg %p201
      %p285 = pneg %p198
      %p286 = scmp.lt.s32.totalorder %s18, 1
      %s287 = scalar_select %p286, %s18, 1
      %s288 = smul.addr %s287, 8
      %s289 = scalar_lea.vmem %s7, %s288
      %p290 = scmp.lt.s32.totalorder %s18, 1
      %s291 = scalar_select %p290, %s18, 1
      %s292 = smul.addr %s291, 8
      %s293 = scalar_lea.vmem %s0, %s292
      %p294 = scmp.lt.s32.totalorder %s18, 1
      %s295 = scalar_select %p294, %s18, 1
      %s296 = smul.addr %s295, 8
      %s297 = scalar_lea.vmem %s1, %s296
      %p298 = scmp.lt.s32.totalorder %s18, 1
      %s299 = scalar_select %p298, %s18, 1
      %s300 = scalar_lea.vmem %s6, %s299
      %p301 = scmp.lt.s32.totalorder %s18, 1
      %s302 = scalar_select %p301, %s18, 1
      %s303 = smul.addr %s302, 8
      %s304 = scalar_lea.vmem %s7, %s303
      %v306 = vld [vmem:[%s293] sm:$0xff]
      %v307 = vld [vmem:[%s297] sm:$0xff]
      %v308 = vpack.c.bf16 %v307, %v307
      %v309 = vmul.f32 %v306, %v306
      %vm310 = vcmask 261120
      %v311 = vsel %vm310, %v309, 0.0
      %312 = vadd.xlane.f32.xlu0 %v311
      %v313 = vpop.xlane.xlu0 %312
      %v314 = vrcp.pop 32.0
      %v315 = vmul.f32 32.0, %v314
      %v316 = vsub.f32 1.0, %v315
      %v317 = vmul.f32 %v314, %v316
      %v318 = vadd.f32 %v314, %v317
      %vm319 = vweird.f32 %v314
      %v320 = vsel %vm319, %v314, %v318
      %v321 = vmul.f32 %v313, %v320
      %v322 = vadd.f32 %v321, 1e-06
      %v323 = vrsqrt.pop %v322
      %v324 = vmul.f32 %v323, %v322
      %v325 = vmul.f32 %v324, %v323
      %v326 = vmul.f32 0.5, %v325
      %v327 = vsub.f32 1.5, %v326
      %v328 = vmul.f32 %v323, %v327
      %vm329 = vweird.f32 %v322
      %vm330 = vweird.f32 %v323
      %vm331 = vmor %vm329, %vm330
      %v332 = vsel %vm331, %v323, %v328
      %v333 = vmul.f32 %v306, %v332
      %v334 = vld [vmem:[%s2] sm:$0x1]
      %v336 = vperm.slane %v334, 0
      %v338 = vmul.f32 %v333, %v336
      %v339 = vpack.c.bf16 %v338, %v338
      %v340 = vld [vmem:[%s3] sm:$0xf]
      %v341 = vld [vmem:[%s3 + $0x4] sm:$0xf]
      %v342 = vld [vmem:[%s3 + $0x8] sm:$0xf]
      %v343 = vld [vmem:[%s3 + $0xc] sm:$0xf]
      %v348 = vunpack.c.l.b16 %v340
      %v349 = vunpack.c.l.b16 %v341
      %v350 = vunpack.c.l.b16 %v342
      %v351 = vunpack.c.l.b16 %v343
      %v352 = vpack.c.b16 %v349, %v348
      %v353 = vpack.c.b16 %v351, %v350
      %v357 = vsel %vm310, %v339, 0
      %359 = vmatpush.bf16.msra.mxu0 0
      %360 = vmatpush.bf16.msra.mxu0 0
      %361 = vmatpush.bf16.msra.mxu0 0
      %362 = vmatpush.bf16.msra.mxu0 0
      %363 = vmatpush.bf16.msra.mxu0 0
      %364 = vmatpush.bf16.msra.mxu0 0
      %365 = vmatpush.bf16.msra.mxu0 %v353
      %366 = vmatpush.bf16.msra.mxu0 %v352
      %367 = vmatmul.bf16.gmra.mxu0 %v357
      %v368 = vpop.f32.mrf.mxu0
      %v369 = vadd.f32 0.0, %v368
      %v370 = vpop.f32.mrf.mxu0
      %371 = vdwg.mxu0
      %v372 = vld [vmem:[%s4] sm:$0xf]
      %v373 = vld [vmem:[%s4 + $0x4] sm:$0xf]
      %v374 = vld [vmem:[%s4 + $0x8] sm:$0xf]
      %v375 = vld [vmem:[%s4 + $0xc] sm:$0xf]
      %v380 = vunpack.c.l.b16 %v372
      %v381 = vunpack.c.l.b16 %v373
      %v382 = vunpack.c.l.b16 %v374
      %v383 = vunpack.c.l.b16 %v375
      %v384 = vpack.c.b16 %v381, %v380
      %v385 = vpack.c.b16 %v383, %v382
      %v389 = vsel %vm310, %v308, 0
      %391 = vmatpush.bf16.msra.mxu0 0
      %392 = vmatpush.bf16.msra.mxu0 0
      %393 = vmatpush.bf16.msra.mxu0 0
      %394 = vmatpush.bf16.msra.mxu0 0
      %395 = vmatpush.bf16.msra.mxu0 0
      %396 = vmatpush.bf16.msra.mxu0 0
      %397 = vmatpush.bf16.msra.mxu0 %v385
      %398 = vmatpush.bf16.msra.mxu0 %v384
      %399 = vmatmul.bf16.gmra.mxu0 %v389
      %v400 = vpop.f32.mrf.mxu0
      %v401 = vadd.f32 0.0, %v400
      %v402 = vpop.f32.mrf.mxu0
      %403 = vdwg.mxu0
      %v404 = vld [vmem:[%s300] sm:$0x1]
      %v405 = vpack.c.bf16 %v369, %v369
      %v406 = vpack.c.bf16 %v401, %v401
      %v408 = vperm.slane %v404, 0
      %vm410 = vcmask 64512
      %v412 = vsel %vm410, %v405, 0
      %v415 = vsel %vm410, %v406, 0
      %417 = vmatpush.bf16.xpose.msra.mxu0 0
      %418 = vmatpush.bf16.xpose.msra.mxu0 0
      %419 = vmatpush.bf16.xpose.msra.mxu0 0
      %420 = vmatpush.bf16.xpose.msra.mxu0 0
      %421 = vmatpush.bf16.xpose.msra.mxu0 0
      %422 = vmatpush.bf16.xpose.msra.mxu0 0
      %423 = vmatpush.bf16.xpose.msra.mxu0 0
      %424 = vmatpush.bf16.xpose.msra.mxu0 %v415
      %425 = vmatmul.bf16.gmra.mxu0 %v412
      %v426 = vpop.f32.mrf.mxu0
      %v427 = vadd.f32 %v408, %v426
      %v428 = vpop.f32.mrf.mxu0
      %429 = vdwg.mxu0
      %v430 = vsel %vm410, %v427, -inf
      %431 = vmax.xlane.f32.xlu0 %v430
      %v432 = vpop.xlane.xlu0 %431
      %v433 = vsub.f32 %v427, %v432
      %v434 = vmul.f32 %v433, 1.442695
      %v435 = vpow.pop %v434
      %v436 = vsel %vm410, %v435, 0.0
      %437 = vadd.xlane.f32.xlu0 %v436
      %v438 = vpop.xlane.xlu0 %437
      %v439 = vrcp.pop %v438
      %v440 = vmul.f32 %v435, %v439
      %v441 = vpack.c.bf16 %v440, %v440
      %443 = vrot.lane.b32.xlu0 %v406, 96
      %v444 = vpop.permute.xlu0 %443
      %v446 = vsel %vm410, %v441, 0
      %vm448 = vcmask 1043456
      %v450 = vsel %vm448, %v444, 0
      %452 = vmatpush.bf16.msra.mxu0 0
      %453 = vmatpush.bf16.msra.mxu0 0
      %454 = vmatpush.bf16.msra.mxu0 0
      %455 = vmatpush.bf16.msra.mxu0 0
      %456 = vmatpush.bf16.msra.mxu0 0
      %457 = vmatpush.bf16.msra.mxu0 0
      %458 = vmatpush.bf16.msra.mxu0 0
      %459 = vmatpush.bf16.msra.mxu0 %v450
      %460 = vmatmul.bf16.gmra.mxu0 %v446
      %v461 = vpop.f32.mrf.mxu0
      %v462 = vadd.f32 0.0, %v461
      %v463 = vpop.f32.mrf.mxu0
      %464 = vdwg.mxu0
      %466 = vrot.lane.b32.xlu0 %v405, 120
      %v467 = vpop.permute.xlu0 %466
      %468 = vrot.lane.b32.xlu0 %v406, 120
      %v469 = vpop.permute.xlu0 %468
      %v471 = vsel %vm410, %v467, 0
      %v474 = vsel %vm410, %v469, 0
      %476 = vmatpush.bf16.xpose.msra.mxu0 0
      %477 = vmatpush.bf16.xpose.msra.mxu0 0
      %478 = vmatpush.bf16.xpose.msra.mxu0 0
      %479 = vmatpush.bf16.xpose.msra.mxu0 0
      %480 = vmatpush.bf16.xpose.msra.mxu0 0
      %481 = vmatpush.bf16.xpose.msra.mxu0 0
      %482 = vmatpush.bf16.xpose.msra.mxu0 0
      %483 = vmatpush.bf16.xpose.msra.mxu0 %v474
      %484 = vmatmul.bf16.gmra.mxu0 %v471
      %v485 = vpop.f32.mrf.mxu0
      %v486 = vadd.f32 %v408, %v485
      %v487 = vpop.f32.mrf.mxu0
      %488 = vdwg.mxu0
      %v489 = vsel %vm410, %v486, -inf
      %490 = vmax.xlane.f32.xlu0 %v489
      %v491 = vpop.xlane.xlu0 %490
      %v492 = vsub.f32 %v486, %v491
      %v493 = vmul.f32 %v492, 1.442695
      %v494 = vpow.pop %v493
      %v495 = vsel %vm410, %v494, 0.0
      %496 = vadd.xlane.f32.xlu0 %v495
      %v497 = vpop.xlane.xlu0 %496
      %v498 = vrcp.pop %v497
      %v499 = vmul.f32 %v494, %v498
      %v500 = vpack.c.bf16 %v499, %v499
      %501 = vrot.lane.b32.xlu0 %v406, 88
      %v502 = vpop.permute.xlu0 %501
      %v504 = vsel %vm410, %v500, 0
      %v507 = vsel %vm448, %v502, 0
      %509 = vmatpush.bf16.msra.mxu0 0
      %510 = vmatpush.bf16.msra.mxu0 0
      %511 = vmatpush.bf16.msra.mxu0 0
      %512 = vmatpush.bf16.msra.mxu0 0
      %513 = vmatpush.bf16.msra.mxu0 0
      %514 = vmatpush.bf16.msra.mxu0 0
      %515 = vmatpush.bf16.msra.mxu0 0
      %516 = vmatpush.bf16.msra.mxu0 %v507
      %517 = vmatmul.bf16.gmra.mxu0 %v504
      %v518 = vpop.f32.mrf.mxu0
      %v519 = vadd.f32 0.0, %v518
      %v520 = vpop.f32.mrf.mxu0
      %521 = vdwg.mxu0
      %522 = vrot.lane.b32.xlu0 %v405, 112
      %v523 = vpop.permute.xlu0 %522
      %524 = vrot.lane.b32.xlu0 %v406, 112
      %v525 = vpop.permute.xlu0 %524
      %v527 = vsel %vm410, %v523, 0
      %v530 = vsel %vm410, %v525, 0
      %532 = vmatpush.bf16.xpose.msra.mxu0 0
      %533 = vmatpush.bf16.xpose.msra.mxu0 0
      %534 = vmatpush.bf16.xpose.msra.mxu0 0
      %535 = vmatpush.bf16.xpose.msra.mxu0 0
      %536 = vmatpush.bf16.xpose.msra.mxu0 0
      %537 = vmatpush.bf16.xpose.msra.mxu0 0
      %538 = vmatpush.bf16.xpose.msra.mxu0 0
      %539 = vmatpush.bf16.xpose.msra.mxu0 %v530
      %540 = vmatmul.bf16.gmra.mxu0 %v527
      %v541 = vpop.f32.mrf.mxu0
      %v542 = vadd.f32 %v408, %v541
      %v543 = vpop.f32.mrf.mxu0
      %544 = vdwg.mxu0
      %v545 = vsel %vm410, %v542, -inf
      %546 = vmax.xlane.f32.xlu0 %v545
      %v547 = vpop.xlane.xlu0 %546
      %v548 = vsub.f32 %v542, %v547
      %v549 = vmul.f32 %v548, 1.442695
      %v550 = vpow.pop %v549
      %v551 = vsel %vm410, %v550, 0.0
      %552 = vadd.xlane.f32.xlu0 %v551
      %v553 = vpop.xlane.xlu0 %552
      %v554 = vrcp.pop %v553
      %v555 = vmul.f32 %v550, %v554
      %v556 = vpack.c.bf16 %v555, %v555
      %557 = vrot.lane.b32.xlu0 %v406, 80
      %v558 = vpop.permute.xlu0 %557
      %v560 = vsel %vm410, %v556, 0
      %v563 = vsel %vm448, %v558, 0
      %565 = vmatpush.bf16.msra.mxu0 0
      %566 = vmatpush.bf16.msra.mxu0 0
      %567 = vmatpush.bf16.msra.mxu0 0
      %568 = vmatpush.bf16.msra.mxu0 0
      %569 = vmatpush.bf16.msra.mxu0 0
      %570 = vmatpush.bf16.msra.mxu0 0
      %571 = vmatpush.bf16.msra.mxu0 0
      %572 = vmatpush.bf16.msra.mxu0 %v563
      %573 = vmatmul.bf16.gmra.mxu0 %v560
      %v574 = vpop.f32.mrf.mxu0
      %v575 = vadd.f32 0.0, %v574
      %v576 = vpop.f32.mrf.mxu0
      %577 = vdwg.mxu0
      %578 = vrot.lane.b32.xlu0 %v405, 104
      %v579 = vpop.permute.xlu0 %578
      %580 = vrot.lane.b32.xlu0 %v406, 104
      %v581 = vpop.permute.xlu0 %580
      %v583 = vsel %vm410, %v579, 0
      %v586 = vsel %vm410, %v581, 0
      %588 = vmatpush.bf16.xpose.msra.mxu0 0
      %589 = vmatpush.bf16.xpose.msra.mxu0 0
      %590 = vmatpush.bf16.xpose.msra.mxu0 0
      %591 = vmatpush.bf16.xpose.msra.mxu0 0
      %592 = vmatpush.bf16.xpose.msra.mxu0 0
      %593 = vmatpush.bf16.xpose.msra.mxu0 0
      %594 = vmatpush.bf16.xpose.msra.mxu0 0
      %595 = vmatpush.bf16.xpose.msra.mxu0 %v586
      %596 = vmatmul.bf16.gmra.mxu0 %v583
      %v597 = vpop.f32.mrf.mxu0
      %v598 = vadd.f32 %v408, %v597
      %v599 = vpop.f32.mrf.mxu0
      %600 = vdwg.mxu0
      %v601 = vsel %vm410, %v598, -inf
      %602 = vmax.xlane.f32.xlu0 %v601
      %v603 = vpop.xlane.xlu0 %602
      %v604 = vsub.f32 %v598, %v603
      %v605 = vmul.f32 %v604, 1.442695
      %v606 = vpow.pop %v605
      %v607 = vsel %vm410, %v606, 0.0
      %608 = vadd.xlane.f32.xlu0 %v607
      %v609 = vpop.xlane.xlu0 %608
      %v610 = vrcp.pop %v609
      %v611 = vmul.f32 %v606, %v610
      %v612 = vpack.c.bf16 %v611, %v611
      %613 = vrot.lane.b32.xlu0 %v406, 72
      %v614 = vpop.permute.xlu0 %613
      %v616 = vsel %vm410, %v612, 0
      %v619 = vsel %vm448, %v614, 0
      %621 = vmatpush.bf16.msra.mxu0 0
      %622 = vmatpush.bf16.msra.mxu0 0
      %623 = vmatpush.bf16.msra.mxu0 0
      %624 = vmatpush.bf16.msra.mxu0 0
      %625 = vmatpush.bf16.msra.mxu0 0
      %626 = vmatpush.bf16.msra.mxu0 0
      %627 = vmatpush.bf16.msra.mxu0 0
      %628 = vmatpush.bf16.msra.mxu0 %v619
      %629 = vmatmul.bf16.gmra.mxu0 %v616
      %v630 = vpop.f32.mrf.mxu0
      %v631 = vadd.f32 0.0, %v630
      %v632 = vpop.f32.mrf.mxu0
      %633 = vdwg.mxu0
      %635 = vrot.lane.b32.xlu0 %v519, 8
      %v636 = vpop.permute.xlu0 %635
      %639 = vrot.lane.b32.xlu0 %v575, 16
      %v640 = vpop.permute.xlu0 %639
      %643 = vrot.lane.b32.xlu0 %v631, 24
      %v644 = vpop.permute.xlu0 %643
      %v646 = vsel %vm410, %v462, %v636
      %vm647 = vcmask 130048
      %v648 = vsel %vm647, %v646, %v640
      %vm649 = vcmask 195584
      %v650 = vsel %vm649, %v648, %v644
      %v651 = vpack.c.bf16 %v650, %v650
      %v652 = vld [vmem:[%s5] sm:$0xf]
      %v653 = vld [vmem:[%s5 + $0x4] sm:$0xf]
      %v654 = vld [vmem:[%s5 + $0x8] sm:$0xf]
      %v655 = vld [vmem:[%s5 + $0xc] sm:$0xf]
      %v660 = vunpack.c.l.b16 %v652
      %v661 = vunpack.c.l.b16 %v653
      %v662 = vunpack.c.l.b16 %v654
      %v663 = vunpack.c.l.b16 %v655
      %v664 = vpack.c.b16 %v661, %v660
      %v665 = vpack.c.b16 %v663, %v662
      %v669 = vsel %vm310, %v651, 0
      %671 = vmatpush.bf16.msra.mxu0 0
      %672 = vmatpush.bf16.msra.mxu0 0
      %673 = vmatpush.bf16.msra.mxu0 0
      %674 = vmatpush.bf16.msra.mxu0 0
      %675 = vmatpush.bf16.msra.mxu0 0
      %676 = vmatpush.bf16.msra.mxu0 0
      %677 = vmatpush.bf16.msra.mxu0 %v665
      %678 = vmatpush.bf16.msra.mxu0 %v664
      %679 = vmatmul.bf16.gmra.mxu0 %v669
      %v680 = vpop.f32.mrf.mxu0
      %v681 = vadd.f32 0.0, %v680
      %v682 = vpop.f32.mrf.mxu0
      %683 = vdwg.mxu0
      %v684 = vadd.f32 %v306, %v681
      %685 = vst.msk [vmem:[%s304] sm:$0xff] %vm310, %v684
      %p686 = scmp.lt.s32.totalorder %s18, 1
      %s687 = scalar_select %p686, %s18, 1
      %s688 = smul.addr %s687, 8
      %s689 = scalar_lea.vmem %s7, %s688
      // Predicated region
      $region49: #{t5_lm_forward.18} parent=47 // pred_check
        %p690 = pneg %p198
      $region50: #{t5_lm_forward.18} parent=47 // pred_check_branch
        %692 = sbr.rel (%p690) target = $region52
      $region51: #{t5_lm_forward.18} parent=47 // pred_region
        _
      $region52: #{t5_lm_forward.18} parent=47 // pred_fallthru
        _
    $region48: #{t5_lm_forward.18} parent=5 // pred_fallthru
      _
    %p693 = scmp.le.s32.totalorder 2, %s13
    // Predicated region
    $region53: #{t5_lm_forward.18} parent=5 // pred_check
      %p694 = pneg %p693
    $region54: #{t5_lm_forward.18} parent=5 // pred_check_branch
      %696 = sbr.rel (%p694) target = $region56
    $region55: #{t5_lm_forward.18} parent=5 // pred_region
      %s697 = ssub.s32 %s13, 2
      // Predicated region
      $region57: #{t5_lm_forward.18} parent=55 // pred_check
        %p698 = pneg %p204
      $region58: #{t5_lm_forward.18} parent=55 // pred_check_branch
        %700 = sbr.rel (%p698) target = $region60
      $region59: #{t5_lm_forward.18} parent=55 // pred_region
        %p701 = scmp.lt.s32.totalorder %s19, 1
        %s702 = scalar_select %p701, %s19, 1
        %s703 = smul.addr %s702, 8
        %s704 = scalar_lea.vmem %s7, %s703
      $region60: #{t5_lm_forward.18} parent=55 // pred_fallthru
        _
    $region56: #{t5_lm_forward.18} parent=5 // pred_fallthru
      _
  $region6: #{t5_lm_forward.18} parent=0 // loop_footer
    %s17 = sadd.s32 1, %s13
  $region7: #{t5_lm_forward.18} parent=0 // loop_footer_branch
    %12 = sbr.rel target = $region3
  $region8: #{t5_lm_forward.18} parent=0 // loop_exit
    _

// kernel: t5_lm_forward.23
$region0: #{t5_lm_forward.23}
  #allocation0 [shape = 'u32[]', space=smem, size = 0x4, offset = 0x4, fixed_abs, tag = 'smem constant byte address 0x4 - core index']
  #allocation1 [shape = 'u32[72,128]{1,0:T(1,128)}', space=vmem, size = 0x9000, scoped, tag = 'internal scratch']
  %s0 = inlined_call_operand.vmem [shape: f32[16,32], index: 0, kind: input, shape index: {}]
  %s1 = inlined_call_operand.vmem [shape: f32[1,32], index: 1, kind: input, shape index: {}]
  %s2 = inlined_call_operand.vmem [shape: bf16[32,256], index: 2, kind: input, shape index: {}]
  %s3 = inlined_call_operand.hbm [shape: f32[16,256], index: 3, kind: output, shape index: {}]
  %s4 = sld [smem:[#allocation0]]
  $region45: #{t5_lm_forward.23} parent=0
    _
  %s6 = ssub.s32 1, %s4
  %s7 = scalar_select 0, %s6, %s4
  $region1: #{t5_lm_forward.23} parent=0
    #allocation2 [shape = 'u8[16384]{0}', space=vmem, size = 0x4000, scoped, tag = 'output window, operand 0']
    #allocation3 [shape = 's32[2]{0}', space=sflag, size = 0x8, scoped, tag = 'scoped memory for t5_lm_forward.23']
    %8 = vsyncpa [#allocation3], 0
    %s9 = scalar_lea.sflag [#allocation3], 1
    %10 = vsyncpa %s9, 0
    loop: start=0, step=1, limit=4
    $region2: #{t5_lm_forward.23} parent=1 // loop_pre_header
      _
    $region3: #{t5_lm_forward.23} parent=1 // loop_header
      %s12 = sphi 0, %s16
      %p13 = scmp.ge.s32.totalorder %s12, 4
      %s22 = sphi 0, %s24
      %s25 = sphi 0, %s22
      %s26 = sphi 0, %s25
      %s42 = sphi 0, %s26
      %s46 = sphi 0, %s46
      %s48 = sphi 0, %s46
      %s49 = sphi 0, %s48
      %s63 = sphi 0, %s49
      %s67 = sphi 0, %s67
      %s69 = sphi 0, %s67
      %s70 = sphi 0, %s69
      %s84 = sphi 0, %s70
      %s90 = sphi 0, %s92
      %s93 = sphi 0, %s90
      %s94 = sphi 0, %s93
      %s110 = sphi 0, %s94
    $region4: #{t5_lm_forward.23} parent=1 // loop_header_branch
      %15 = sbr.rel (%p13) target = $region8
    $region5: #{t5_lm_forward.23} parent=1 // loop_body
      %s17 = ssub.s32 %s12, 1
      %s18 = ssub.s32 %s12, 2
      %s19 = sadd.s32 %s12, 1
      %s20 = ssub.s32 %s12, %s19
      %p21 = scmp.eq.s32.totalorder %s20, 0
      %s23 = sadd.s32 %s22, 1
      %s24 = scalar_select %p21, %s22, %s23
      %p27 = pneg %p21
      %p28 = scmp.eq.s32.totalorder %s12, 1
      %p29 = por %p27, %p28
      %p30 = scmp.ne.s32.totalorder %s22, %s25
      %p31 = scmp.eq.s32.totalorder %s12, 0
      %p32 = por %p30, %p31
      %p33 = scmp.ne.s32.totalorder %s22, %s25
      %p34 = scmp.eq.s32.totalorder %s17, 1
      %p35 = por %p33, %p34
      %p36 = scmp.ne.s32.totalorder %s25, %s26
      %p37 = scmp.eq.s32.totalorder %s17, 0
      %p38 = por %p36, %p37
      %p39 = scmp.ne.s32.totalorder %s25, %s26
      %p40 = scmp.eq.s32.totalorder %s18, 1
      %p41 = por %p39, %p40
      %p43 = scmp.ne.s32.totalorder %s26, %s42
      %p44 = scmp.eq.s32.totalorder %s18, 0
      %p45 = por %p43, %p44
      %s47 = sadd.s32 %s46, 1
      %p50 = scmp.eq.s32.totalorder %s12, 1
      %p51 = scmp.ne.s32.totalorder %s46, %s48
      %p52 = scmp.eq.s32.totalorder %s12, 0
      %p53 = por %p51, %p52
      %p54 = scmp.ne.s32.totalorder %s46, %s48
      %p55 = scmp.eq.s32.totalorder %s17, 1
      %p56 = por %p54, %p55
      %p57 = scmp.ne.s32.totalorder %s48, %s49
      %p58 = scmp.eq.s32.totalorder %s17, 0
      %p59 = por %p57, %p58
      %p60 = scmp.ne.s32.totalorder %s48, %s49
      %p61 = scmp.eq.s32.totalorder %s18, 1
      %p62 = por %p60, %p61
      %p64 = scmp.ne.s32.totalorder %s49, %s63
      %p65 = scmp.eq.s32.totalorder %s18, 0
      %p66 = por %p64, %p65
      %s68 = sadd.s32 %s67, 1
      %p71 = scmp.eq.s32.totalorder %s12, 1
      %p72 = scmp.ne.s32.totalorder %s67, %s69
      %p73 = scmp.eq.s32.totalorder %s12, 0
      %p74 = por %p72, %p73
      %p75 = scmp.ne.s32.totalorder %s67, %s69
      %p76 = scmp.eq.s32.totalorder %s17, 1
      %p77 = por %p75, %p76
      %p78 = scmp.ne.s32.totalorder %s69, %s70
      %p79 = scmp.eq.s32.totalorder %s17, 0
      %p80 = por %p78, %p79
      %p81 = scmp.ne.s32.totalorder %s69, %s70
      %p82 = scmp.eq.s32.totalorder %s18, 1
      %p83 = por %p81, %p82
      %p85 = scmp.ne.s32.totalorder %s70, %s84
      %p86 = scmp.eq.s32.totalorder %s18, 0
      %p87 = por %p85, %p86
      %s88 = ssub.s32 %s12, %s19
      %p89 = scmp.eq.s32.totalorder %s88, 0
      %s91 = sadd.s32 %s90, 1
      %s92 = scalar_select %p89, %s90, %s91
      %p95 = pneg %p89
      %p96 = scmp.eq.s32.totalorder %s12, 1
      %p97 = por %p95, %p96
      %p98 = scmp.ne.s32.totalorder %s90, %s93
      %p99 = scmp.eq.s32.totalorder %s12, 0
      %p100 = por %p98, %p99
      %p101 = scmp.ne.s32.totalorder %s90, %s93
      %p102 = scmp.eq.s32.totalorder %s17, 1
      %p103 = por %p101, %p102
      %p104 = scmp.ne.s32.totalorder %s93, %s94
      %p105 = scmp.eq.s32.totalorder %s17, 0
      %p106 = por %p104, %p105
      %p107 = scmp.ne.s32.totalorder %s93, %s94
      %p108 = scmp.eq.s32.totalorder %s18, 1
      %p109 = por %p107, %p108
      %p111 = scmp.ne.s32.totalorder %s94, %s110
      %p112 = scmp.eq.s32.totalorder %s18, 0
      %p113 = por %p111, %p112
      %p114 = scmp.le.s32.totalorder 1, %s12
      %p115 = scmp.lt.s32.totalorder %s12, 3
      %p116 = pnand %p114, %p115
      %p117 = pneg %p116
      // Predicated region
      $region9: #{t5_lm_forward.23} parent=5 // pred_check
        _
      $region10: #{t5_lm_forward.23} parent=5 // pred_check_branch
        %119 = sbr.rel (%p116) target = $region12
      $region11: #{t5_lm_forward.23} parent=5 // pred_region
        %s120 = ssub.s32 %s12, 1
        // Predicated region
        $region13: #{t5_lm_forward.23} parent=11 // pred_check
          %p121 = pneg %p59
        $region14: #{t5_lm_forward.23} parent=11 // pred_check_branch
          %123 = sbr.rel (%p121) target = $region16
        $region15: #{t5_lm_forward.23} parent=11 // pred_region
          _
        $region16: #{t5_lm_forward.23} parent=11 // pred_fallthru
          _
        // Predicated region
        $region17: #{t5_lm_forward.23} parent=11 // pred_check
          %p124 = pneg %p80
        $region18: #{t5_lm_forward.23} parent=11 // pred_check_branch
          %126 = sbr.rel (%p124) target = $region20
        $region19: #{t5_lm_forward.23} parent=11 // pred_region
          _
        $region20: #{t5_lm_forward.23} parent=11 // pred_fallthru
          _
      $region12: #{t5_lm_forward.23} parent=5 // pred_fallthru
        _
      %p127 = scmp.lt.s32.totalorder %s12, 2
      // Predicated region
      $region21: #{t5_lm_forward.23} parent=5 // pred_check
        %p128 = pneg %p127
      $region22: #{t5_lm_forward.23} parent=5 // pred_check_branch
        %130 = sbr.rel (%p128) target = $region24
      $region23: #{t5_lm_forward.23} parent=5 // pred_region
        // Predicated region
        $region25: #{t5_lm_forward.23} parent=23 // pred_check
          %p131 = pneg %p32
        $region26: #{t5_lm_forward.23} parent=23 // pred_check_branch
          %133 = sbr.rel (%p131) target = $region28
        $region27: #{t5_lm_forward.23} parent=23 // pred_region
          %p134 = scmp.lt.s32.totalorder %s12, 1
          %s135 = scalar_select %p134, %s12, 1
          %s136 = smul.addr %s135, 8
          %s137 = scalar_lea.vmem %s0, %s136
        $region28: #{t5_lm_forward.23} parent=23 // pred_fallthru
          _
      $region24: #{t5_lm_forward.23} parent=5 // pred_fallthru
        _
      %p138 = scmp.le.s32.totalorder 1, %s12
      %p139 = scmp.lt.s32.totalorder %s12, 3
      %p140 = pnand %p138, %p139
      %p141 = pneg %p140
      // Predicated region
      $region29: #{t5_lm_forward.23} parent=5 // pred_check
        _
      $region30: #{t5_lm_forward.23} parent=5 // pred_check_branch
        %143 = sbr.rel (%p140) target = $region32
      $region31: #{t5_lm_forward.23} parent=5 // pred_region
        %s144 = ssub.s32 %s12, 1
        %p145 = scmp.lt.s32.totalorder %s17, 1
        %s146 = scalar_select %p145, %s17, 1
        %s147 = smul.addr %s146, 8
        %s148 = scalar_lea.vmem %s0, %s147
        %p149 = pneg %p38
        %p150 = pneg %p35
        %p151 = pneg %p59
        %p152 = pneg %p56
        %p153 = pneg %p80
        %p154 = pneg %p77
        %p155 = pneg %p106
        %p156 = pneg %p103
        %s157 = sand.u32 %s93, 1
        %s158 = scalar_lea.sflag [#allocation3], %s157
        %s159 = sand.u32 %s93, 1
        %s160 = smul.addr %s159, 16
        %s161 = scalar_lea.vmem [#allocation2], %s160
        %p162 = scmp.lt.s32.totalorder %s17, 1
        %s163 = scalar_select %p162, %s17, 1
        %s164 = smul.addr %s163, 8
        %s165 = scalar_lea.vmem %s0, %s164
        %v167 = vld [vmem:[%s165] sm:$0xff]
        %v168 = vmul.f32 %v167, %v167
        %vm169 = vcmask 261120
        %v170 = vsel %vm169, %v168, 0.0
        %171 = vadd.xlane.f32.xlu0 %v170
        %v172 = vpop.xlane.xlu0 %171
        %v173 = vrcp.pop 32.0
        %v174 = vmul.f32 32.0, %v173
        %v175 = vsub.f32 1.0, %v174
        %v176 = vmul.f32 %v173, %v175
        %v177 = vadd.f32 %v173, %v176
        %vm178 = vweird.f32 %v173
        %v179 = vsel %vm178, %v173, %v177
        %v180 = vmul.f32 %v172, %v179
        %v181 = vadd.f32 %v180, 1e-06
        %v182 = vrsqrt.pop %v181
        %v183 = vmul.f32 %v182, %v181
        %v184 = vmul.f32 %v183, %v182
        %v185 = vmul.f32 0.5, %v184
        %v186 = vsub.f32 1.5, %v185
        %v187 = vmul.f32 %v182, %v186
        %vm188 = vweird.f32 %v181
        %vm189 = vweird.f32 %v182
        %vm190 = vmor %vm188, %vm189
        %v191 = vsel %vm190, %v182, %v187
        %v192 = vmul.f32 %v167, %v191
        %v193 = vld [vmem:[%s1] sm:$0x1]
        %v195 = vperm.slane %v193, 0
        %v197 = vmul.f32 %v192, %v195
        %v198 = vpack.c.bf16 %v197, %v197
        %v199 = vld [vmem:[%s2] sm:$0xff]
        %v200 = vld [vmem:[%s2 + $0x8] sm:$0xff]
        %v201 = vld [vmem:[%s2 + $0x10] sm:$0xff]
        %v202 = vld [vmem:[%s2 + $0x18] sm:$0xff]
        %v207 = vunpack.c.l.b16 %v199
        %v208 = vunpack.c.h.b16 %v199
        %v209 = vunpack.c.l.b16 %v200
        %v210 = vunpack.c.h.b16 %v200
        %v211 = vunpack.c.l.b16 %v201
        %v212 = vunpack.c.h.b16 %v201
        %v213 = vunpack.c.l.b16 %v202
        %v214 = vunpack.c.h.b16 %v202
        %v215 = vpack.c.b16 %v209, %v207
        %v216 = vpack.c.b16 %v210, %v208
        %v217 = vpack.c.b16 %v213, %v211
        %v218 = vpack.c.b16 %v214, %v212
        %v224 = vsel %vm169, %v198, 0
        %226 = vmatpush.bf16.msra.mxu0 0
        %227 = vmatpush.bf16.msra.mxu0 0
        %228 = vmatpush.bf16.msra.mxu0 0
        %229 = vmatpush.bf16.msra.mxu0 0
        %230 = vmatpush.bf16.msra.mxu0 0
        %231 = vmatpush.bf16.msra.mxu0 0
        %232 = vmatpush.bf16.msra.mxu0 %v217
        %233 = vmatpush.bf16.msra.mxu0 %v215
        %234 = vmatmul.bf16.gmra.mxu0 %v224
        %v235 = vpop.f32.mrf.mxu0
        %v236 = vadd.f32 0.0, %v235
        %v237 = vpop.f32.mrf.mxu0
        %238 = vdwg.mxu0
        %239 = vmatpush.bf16.msra.mxu0 0
        %240 = vmatpush.bf16.msra.mxu0 0
        %241 = vmatpush.bf16.msra.mxu0 0
        %242 = vmatpush.bf16.msra.mxu0 0
        %243 = vmatpush.bf16.msra.mxu0 0
        %244 = vmatpush.bf16.msra.mxu0 0
        %245 = vmatpush.bf16.msra.mxu0 %v218
        %246 = vmatpush.bf16.msra.mxu0 %v216
        %247 = vmatmul.bf16.gmra.mxu0 %v224
        %v248 = vpop.f32.mrf.mxu0
        %v249 = vadd.f32 0.0, %v248
        %v250 = vpop.f32.mrf.mxu0
        %251 = vdwg.mxu0
        %252 = vst [vmem:[%s161] sm:$0xff] %v236
        %253 = vst [vmem:[%s161 + $0x8] sm:$0xff] %v249
        %s254 = sand.u32 %s93, 1
        %s255 = scalar_lea.sflag [#allocation3], %s254
        %s256 = sand.u32 %s93, 1
        %s257 = smul.addr %s256, 16
        %s258 = scalar_lea.vmem [#allocation2], %s257
        // Predicated region
        $region33: #{t5_lm_forward.23} parent=31 // pred_check
          %p259 = pneg %p103
        $region34: #{t5_lm_forward.23} parent=31 // pred_check_branch
          %261 = sbr.rel (%p259) target = $region36
        $region35: #{t5_lm_forward.23} parent=31 // pred_region
          %263 = vsyncadd %s255, 0
          %s264 = smul.addr %s17, 2
          %s265 = smul.addr %s264, 8
          %s266 = scalar_lea.hbm %s3, %s265
          %s268 = sshll.u32 %s258, 4
          %s269 = int_to_ptr.vmem [resolvable:$true] %s268
          %s270 = sshll.u32 %s266, 4
          %s271 = int_to_ptr.hbm [resolvable:$true] %s270
          %273 = dma.vmem_to_hbm [thread:$0]  %s269, 256, %s271, %s255
        $region36: #{t5_lm_forward.23} parent=31 // pred_fallthru
          _
      $region32: #{t5_lm_forward.23} parent=5 // pred_fallthru
        _
      %p274 = scmp.le.s32.totalorder 2, %s12
      // Predicated region
      $region37: #{t5_lm_forward.23} parent=5 // pred_check
        %p275 = pneg %p274
      $region38: #{t5_lm_forward.23} parent=5 // pred_check_branch
        %277 = sbr.rel (%p275) target = $region40
      $region39: #{t5_lm_forward.23} parent=5 // pred_region
        %s278 = ssub.s32 %s12, 2
        // Predicated region
        $region41: #{t5_lm_forward.23} parent=39 // pred_check
          %p279 = pneg %p109
        $region42: #{t5_lm_forward.23} parent=39 // pred_check_branch
          %281 = sbr.rel (%p279) target = $region44
        $region43: #{t5_lm_forward.23} parent=39 // pred_region
          %s282 = sand.u32 %s94, 1
          %s283 = scalar_lea.sflag [#allocation3], %s282
          %s284 = sand.u32 %s94, 1
          %s285 = smul.addr %s284, 16
          %s286 = scalar_lea.vmem [#allocation2], %s285
          %288 = dma.done %s283, 256
        $region44: #{t5_lm_forward.23} parent=39 // pred_fallthru
          _
      $region40: #{t5_lm_forward.23} parent=5 // pred_fallthru
        _
    $region6: #{t5_lm_forward.23} parent=1 // loop_footer
      %s16 = sadd.s32 1, %s12
    $region7: #{t5_lm_forward.23} parent=1 // loop_footer_branch
      %11 = sbr.rel target = $region3
    $region8: #{t5_lm_forward.23} parent=1 // loop_exit
      _
    %289 = vsyncpa [#allocation3], 1
    %s290 = scalar_lea.sflag [#allocation3], 1
    %291 = vsyncpa %s290, 1

</llo_original>
